<compile_context>
chip_gen: v7x
topology: tpu7x:2x2x1
jax: 0.10.0
libtpu: 0.0.40
codegen_flags: <defaults>
</compile_context>

<pallas_src>
import numpy as np
import jax
import jax.numpy as jnp
from jax.experimental import pallas as pl
from jax.experimental.pallas import tpu as pltpu

NUM_FEATURES = 1000   # GoogLeNet logit width
NUM_CLASSES = 10      # != 1000 -> the nn.Linear(1000, num_classes) branch
LANE = 128
SUBLANE = 8


def _round_up(x, m):
    return ((x + m - 1) // m) * m


def _cdiv(a, b):
    return (a + b - 1) // b


def _factory_kernel(o0_ref, o1_ref, o2_ref, w_ref, b_ref, out_ref):
    """out = o0 @ W0 + o1 @ W1 + o2 @ W2 + b.

    W_i are pre-scaled by the normalized loss_split in the wrapper, so the
    combine happens inside the MXU with f32 accumulation (the combined sum is
    never rounded to bf16; only the raw logits/weights are).

    o*_ref : VMEM (TB, K)     f32 logit tiles (K = 1000, full-dim block)
    w_ref  : VMEM (3, K, Np)  bf16 pre-scaled weights, resident across grid
    b_ref  : VMEM (1, Np)     f32 bias, resident across grid
    out_ref: VMEM (TB, Np)    f32
    """
    acc = jnp.dot(o0_ref[...].astype(jnp.bfloat16), w_ref[0],
                  preferred_element_type=jnp.float32)
    acc = acc + jnp.dot(o1_ref[...].astype(jnp.bfloat16), w_ref[1],
                        preferred_element_type=jnp.float32)
    acc = acc + jnp.dot(o2_ref[...].astype(jnp.bfloat16), w_ref[2],
                        preferred_element_type=jnp.float32)
    out_ref[...] = acc + b_ref[...]


def _per_generation_budget():
    """(max tile rows, scoped VMEM limit) sized per TPU generation."""
    try:
        vmem_cap = pltpu.get_tpu_info().vmem_capacity_bytes
    except Exception:
        vmem_cap = 128 * 1024 * 1024
    if vmem_cap <= 64 * 1024 * 1024:
        # v7x-class TensorCore: 64 MiB physical -> ~28 MiB of buffers at tb=1024
        return 1024, 48 * 1024 * 1024
    # v5e / v6e: 128 MiB physical -> ~54 MiB of buffers at tb=2048
    return 2048, 80 * 1024 * 1024


def _choose_tile_rows(B, block_cap):
    """Tile rows: >=2 grid blocks whenever possible (so the "parallel" batch
    axis shards across v7x's two TensorCores), multiple of 8, derived from B so
    row-padding waste is bounded by < one tile."""
    nblocks = max(2, _cdiv(B, block_cap))
    nblocks = min(nblocks, max(1, B // SUBLANE))
    tb = _round_up(_cdiv(B, nblocks), SUBLANE)
    return min(tb, block_cap)


def google_factory_pallas(loss_split, o0, o1, o2, lin_w, lin_b):
    """o0/o1/o2: [B, K] f32 logits. lin_w: [K, C]. lin_b: [C]. Returns [B, C] f32."""
    B, K = o0.shape
    C = lin_w.shape[1]
    n_pad = _round_up(max(C, LANE), LANE)      # 10 -> 128: lane-dense stores
    block_cap, vmem_limit = _per_generation_budget()
    tb = _choose_tile_rows(B, block_cap)
    b_pad = _round_up(B, tb)

    # Fold the normalized loss_split into the (tiny) linear weight.  No guard
    # against sum(loss_split) == 0, matching the PyTorch semantics.
    ls = loss_split.astype(jnp.float32)
    ls = ls / jnp.sum(ls)
    w_scaled = ls[:, None, None] * lin_w.astype(jnp.float32)[None]       # (3, K, C)
    w_scaled = jnp.pad(w_scaled, ((0, 0), (0, 0), (0, n_pad - C)))
    w_scaled = w_scaled.astype(jnp.bfloat16)                             # (3, K, Np)
    bias = jnp.pad(lin_b.astype(jnp.float32), (0, n_pad - C)).reshape(1, n_pad)

    # The big logit tensors are NOT padded along K and NOT converted in the
    # wrapper.  Rows are only padded when B is not a tile multiple.
    if b_pad != B:
        pad_rows = ((0, b_pad - B), (0, 0))
        o0 = jnp.pad(o0, pad_rows)
        o1 = jnp.pad(o1, pad_rows)
        o2 = jnp.pad(o2, pad_rows)

    grid = (b_pad // tb,)
    out = pl.pallas_call(
        _factory_kernel,
        out_shape=jax.ShapeDtypeStruct((b_pad, n_pad), jnp.float32),
        grid=grid,
        in_specs=[
            # last dim == full array dim (1000): legal block even though
            # 1000 % 128 != 0; bf16 cast happens in-kernel.
            pl.BlockSpec((tb, K), lambda i: (i, 0)),
            pl.BlockSpec((tb, K), lambda i: (i, 0)),
            pl.BlockSpec((tb, K), lambda i: (i, 0)),
            pl.BlockSpec((3, K, n_pad), lambda i: (0, 0, 0)),   # weight: resident
            pl.BlockSpec((1, n_pad), lambda i: (0, 0)),         # bias: resident
        ],
        out_specs=pl.BlockSpec((tb, n_pad), lambda i: (i, 0)),
        compiler_params=pltpu.CompilerParams(
            dimension_semantics=("parallel",),   # batch blocks shard over v7x's 2 TCs
            vmem_limit_bytes=vmem_limit,
        ),
    )(o0, o1, o2, w_scaled, bias)
    # Padded batch rows (bias-valued) and padded lanes are sliced away here.
    return out[:B, :C]


def synthetic_backbone(x, params):
    """Deterministic stand-in for self.model: returns (main, aux1, aux2) f32 logits."""
    # global average pool over spatial dims: [B, 3, H, W] -> [B, 3]
    pooled = jnp.mean(x, axis=(2, 3))
    heads = tuple(pooled @ params[f"head_w{i}"] + params[f"head_b{i}"]
                  for i in range(3))
    return heads


def google_factory_forward(x, params):
    assert x.shape[1] == 3, "Only three-channel data is supported."
    # TODO(synk): the module's `isinstance(out, Tensor)` single-output path and
    # the nn.Identity branch for num_classes==1000 are not exercised here.
    o0, o1, o2 = synthetic_backbone(x, params)
    return google_factory_pallas(params["loss_split"], o0, o1, o2,
                                 params["lin_w"], params["lin_b"])


def init_params(key):
    ks = jax.random.split(key, 8)
    params = {
        # GoogleFactory.__init__ parameters
        "loss_split": jnp.array([0.625, 0.1875, 0.1875], dtype=jnp.float32),
        "lin_w": jax.random.normal(ks[0], (NUM_FEATURES, NUM_CLASSES),
                                   jnp.float32) * 0.02,
        "lin_b": jax.random.normal(ks[1], (NUM_CLASSES,), jnp.float32) * 0.01,
    }
    # synthetic backbone heads (stand-in for the wrapped GoogLeNet)
    for i in range(3):
        params[f"head_w{i}"] = jax.random.normal(
            ks[2 + 2 * i], (3, NUM_FEATURES), jnp.float32) * 0.1
        params[f"head_b{i}"] = jax.random.normal(
            ks[3 + 2 * i], (NUM_FEATURES,), jnp.float32) * 0.01
    return params


def reference_forward(x, params):
    """Pure-JAX f32 reference matching the PyTorch semantics."""
    o0, o1, o2 = synthetic_backbone(x, params)
    ls = params["loss_split"]
    ls = ls / jnp.sum(ls)
    out = ls[0] * o0 + ls[1] * o1 + ls[2] * o2
    return out @ params["lin_w"] + params["lin_b"]


if __name__ == "__main__":
    key = jax.random.PRNGKey(0)
    pkey, xkey = jax.random.split(key)
    params = init_params(pkey)

    # NCHW input, 3 channels required by the module's assert
    x = jax.random.normal(xkey, (2, 3, 16, 16), jnp.float32)

    out = google_factory_forward(x, params)
    out = jax.block_until_ready(out)

    ref = reference_forward(x, params)
    assert out.shape == (2, NUM_CLASSES)
    # Single bf16 rounding of logits/weight; accumulation stays f32 in the MXU,
    # so tolerance is tighter than the previous (double-rounded) version.
    np.testing.assert_allclose(np.asarray(out), np.asarray(ref),
                               rtol=2e-2, atol=2e-3)
    print("KERNEL_OK")
</pallas_src>

<mosaic_0001>
module attributes {stable_mosaic.version = 11 : i64} {
  func.func @_factory_kernel(%arg0: i32, %arg1: memref<8x1000xf32, #tpu.memory_space<vmem>>, %arg2: memref<8x1000xf32, #tpu.memory_space<vmem>>, %arg3: memref<8x1000xf32, #tpu.memory_space<vmem>>, %arg4: memref<3x1000x128xbf16, #tpu.memory_space<vmem>>, %arg5: memref<1x128xf32, #tpu.memory_space<vmem>>, %arg6: memref<8x128xf32, #tpu.memory_space<vmem>>) attributes {dimension_semantics = [#tpu.dimension_semantics<parallel>], iteration_bounds = array<i64: 1>, scalar_prefetch = 0 : i64, scratch_operands = 0 : i64, tpu.core_type = #tpu.core_type<tc>, window_params = [{transform_indices = @transform_0, window_bounds = array<i64: 8, 1000>}, {transform_indices = @transform_1, window_bounds = array<i64: 8, 1000>}, {transform_indices = @transform_2, window_bounds = array<i64: 8, 1000>}, {pipeline_mode = #tpu.pipeline_mode<synchronous>, transform_indices = @transform_3, window_bounds = array<i64: 3, 1000, 128>}, {pipeline_mode = #tpu.pipeline_mode<synchronous>, transform_indices = @transform_4, window_bounds = array<i64: 1, 128>}, {transform_indices = @transform_5, window_bounds = array<i64: 8, 128>}]} {
    %c0 = arith.constant 0 : index
    %c0_0 = arith.constant 0 : index
    %0 = vector.load %arg1[%c0, %c0_0] : memref<8x1000xf32, #tpu.memory_space<vmem>>, vector<8x1000xf32>
    %1 = arith.truncf %0 : vector<8x1000xf32> to vector<8x1000xbf16>
    %c0_1 = arith.constant 0 : index
    %c0_2 = arith.constant 0 : index
    %c0_3 = arith.constant 0 : index
    %2 = vector.load %arg4[%c0_1, %c0_2, %c0_3] : memref<3x1000x128xbf16, #tpu.memory_space<vmem>>, vector<1x1000x128xbf16>
    %3 = vector.shape_cast %2 : vector<1x1000x128xbf16> to vector<1000x128xbf16>
    %cst = arith.constant dense<0.000000e+00> : vector<8x128xf32>
    %4 = tpu.matmul %1, %3, %cst {dimension_numbers = #tpu.dot_dimension_numbers<[1], [0], [0], [1], [0, 0, 1, 1], [], []>} : vector<8x1000xbf16>, vector<1000x128xbf16>, vector<8x128xf32> -> vector<8x128xf32>
    %c0_4 = arith.constant 0 : index
    %c0_5 = arith.constant 0 : index
    %5 = vector.load %arg2[%c0_4, %c0_5] : memref<8x1000xf32, #tpu.memory_space<vmem>>, vector<8x1000xf32>
    %6 = arith.truncf %5 : vector<8x1000xf32> to vector<8x1000xbf16>
    %c1 = arith.constant 1 : index
    %c0_6 = arith.constant 0 : index
    %c0_7 = arith.constant 0 : index
    %7 = vector.load %arg4[%c1, %c0_6, %c0_7] : memref<3x1000x128xbf16, #tpu.memory_space<vmem>>, vector<1x1000x128xbf16>
    %8 = vector.shape_cast %7 : vector<1x1000x128xbf16> to vector<1000x128xbf16>
    %cst_8 = arith.constant dense<0.000000e+00> : vector<8x128xf32>
    %9 = tpu.matmul %6, %8, %cst_8 {dimension_numbers = #tpu.dot_dimension_numbers<[1], [0], [0], [1], [0, 0, 1, 1], [], []>} : vector<8x1000xbf16>, vector<1000x128xbf16>, vector<8x128xf32> -> vector<8x128xf32>
    %10 = arith.addf %4, %9 : vector<8x128xf32>
    %c0_9 = arith.constant 0 : index
    %c0_10 = arith.constant 0 : index
    %11 = vector.load %arg3[%c0_9, %c0_10] : memref<8x1000xf32, #tpu.memory_space<vmem>>, vector<8x1000xf32>
    %12 = arith.truncf %11 : vector<8x1000xf32> to vector<8x1000xbf16>
    %c2 = arith.constant 2 : index
    %c0_11 = arith.constant 0 : index
    %c0_12 = arith.constant 0 : index
    %13 = vector.load %arg4[%c2, %c0_11, %c0_12] : memref<3x1000x128xbf16, #tpu.memory_space<vmem>>, vector<1x1000x128xbf16>
    %14 = vector.shape_cast %13 : vector<1x1000x128xbf16> to vector<1000x128xbf16>
    %cst_13 = arith.constant dense<0.000000e+00> : vector<8x128xf32>
    %15 = tpu.matmul %12, %14, %cst_13 {dimension_numbers = #tpu.dot_dimension_numbers<[1], [0], [0], [1], [0, 0, 1, 1], [], []>} : vector<8x1000xbf16>, vector<1000x128xbf16>, vector<8x128xf32> -> vector<8x128xf32>
    %16 = arith.addf %10, %15 : vector<8x128xf32>
    %c0_14 = arith.constant 0 : index
    %c0_15 = arith.constant 0 : index
    %17 = vector.load %arg5[%c0_14, %c0_15] : memref<1x128xf32, #tpu.memory_space<vmem>>, vector<1x128xf32>
    %18 = vector.broadcast %17 : vector<1x128xf32> to vector<8x128xf32>
    %19 = arith.addf %16, %18 : vector<8x128xf32>
    %c0_16 = arith.constant 0 : index
    %c0_17 = arith.constant 0 : index
    %20 = vector.load %arg6[%c0_16, %c0_17] : memref<8x128xf32, #tpu.memory_space<vmem>>, vector<8x128xf32>
    tpu.vector_store %arg6[%c0_16, %c0_17], %19 {strides = array<i32>} : memref<8x128xf32, #tpu.memory_space<vmem>>, vector<8x128xf32>,
    return
  }
  func.func @transform_0(%arg0: i32) -> (i32, i32) {
    %c0_i32 = arith.constant 0 : i32
    %c0_i32_0 = arith.constant 0 : i32
    return %arg0, %c0_i32 : i32, i32
  }
  func.func @transform_1(%arg0: i32) -> (i32, i32) {
    %c0_i32 = arith.constant 0 : i32
    %c0_i32_0 = arith.constant 0 : i32
    return %arg0, %c0_i32 : i32, i32
  }
  func.func @transform_2(%arg0: i32) -> (i32, i32) {
    %c0_i32 = arith.constant 0 : i32
    %c0_i32_0 = arith.constant 0 : i32
    return %arg0, %c0_i32 : i32, i32
  }
  func.func @transform_3(%arg0: i32) -> (i32, i32, i32) {
    %c0_i32 = arith.constant 0 : i32
    %c0_i32_0 = arith.constant 0 : i32
    %c0_i32_1 = arith.constant 0 : i32
    %c0_i32_2 = arith.constant 0 : i32
    return %c0_i32, %c0_i32_0, %c0_i32_1 : i32, i32, i32
  }
  func.func @transform_4(%arg0: i32) -> (i32, i32) {
    %c0_i32 = arith.constant 0 : i32
    %c0_i32_0 = arith.constant 0 : i32
    %c0_i32_1 = arith.constant 0 : i32
    return %c0_i32, %c0_i32_0 : i32, i32
  }
  func.func @transform_5(%arg0: i32) -> (i32, i32) {
    %c0_i32 = arith.constant 0 : i32
    %c0_i32_0 = arith.constant 0 : i32
    return %arg0, %c0_i32 : i32, i32
  }
}

</mosaic_0001>

<llo_original>
// kernel: tpu_custom_call.1
$region0: #{tpu_custom_call.1}
  #allocation0 [shape = 'u32[]', space=smem, size = 0x4, offset = 0x4, fixed_abs, tag = 'smem constant byte address 0x4 - core index']
  #allocation1 [shape = 'u32[144,128]{1,0:T(1,128)}', space=vmem, size = 0x12000, scoped, tag = 'internal scratch']
  %s0 = inlined_call_operand.hbm [shape: f32[8,1000], index: 0, kind: input, shape index: {}]
  %s1 = inlined_call_operand.hbm [shape: f32[8,1000], index: 1, kind: input, shape index: {}]
  %s2 = inlined_call_operand.hbm [shape: f32[8,1000], index: 2, kind: input, shape index: {}]
  %s3 = inlined_call_operand.hbm [shape: bf16[3,1000,128], index: 3, kind: input, shape index: {}]
  %s4 = inlined_call_operand.hbm [shape: f32[1,128], index: 4, kind: input, shape index: {}]
  %s5 = inlined_call_operand.hbm [shape: f32[8,128], index: 5, kind: output, shape index: {}]
  %s6 = sld [smem:[#allocation0]]
  $region50: #{tpu_custom_call.1} parent=0
    _
  %s8 = ssub.s32 1, %s6
  %s9 = scalar_select 0, %s8, %s6
  $region1: #{tpu_custom_call.1} parent=0
    #allocation2 [shape = 'u8[32768]{0}', space=vmem, size = 0x8000, scoped, tag = 'input window, operand 0, single buffered']
    #allocation3 [shape = 's32[1]{0}', space=sflag, size = 0x4, scoped, tag = 'scoped memory for tpu_custom_call.1']
    #allocation4 [shape = 's32[1]{0}', space=sflag, size = 0x4, scoped, tag = 'scoped memory for tpu_custom_call.1']
    #allocation5 [shape = 'u8[32768]{0}', space=vmem, size = 0x8000, scoped, tag = 'input window, operand 1, single buffered']
    #allocation6 [shape = 's32[1]{0}', space=sflag, size = 0x4, scoped, tag = 'scoped memory for tpu_custom_call.1']
    #allocation7 [shape = 'u8[32768]{0}', space=vmem, size = 0x8000, scoped, tag = 'input window, operand 2, single buffered']
    #allocation8 [shape = 'u8[768000]{0}', space=vmem, size = 0xbb800, scoped, tag = 'input window, operand 3, single buffered']
    #allocation9 [shape = 's32[1]{0}', space=sflag, size = 0x4, scoped, tag = 'scoped memory for tpu_custom_call.1']
    #allocation10 [shape = 'u8[512]{0}', space=vmem, size = 0x400, scoped, tag = 'input window, operand 4, single buffered']
    #allocation11 [shape = 'u8[4096]{0}', space=vmem, size = 0x1000, scoped, tag = 'output window, operand 0, single buffered']
    %10 = vsyncpa [#allocation3], 0
    %11 = vsyncpa [#allocation6], 0
    %12 = vsyncpa [#allocation9], 0
    %13 = vsyncpa [#allocation4], 0
    // Predicated region
    $region2: #{tpu_custom_call.1} parent=1 // pred_check
      _
    $region3: #{tpu_custom_call.1} parent=1 // pred_check_branch
      %15 = sbr.rel (0) target = $region5
    $region4: #{tpu_custom_call.1} parent=1 // pred_region
      %s17 = ssub.s32 1024, 1024
      %18 = vsyncadd [#allocation3], %s17
      %s20 = sshll.u32 [#allocation2], 4
      %s21 = int_to_ptr.vmem [resolvable:$true] %s20
      %23 = dma.hbm_to_vmem [thread:$0]  %s0, 1024, %s21, [#allocation3]
    $region5: #{tpu_custom_call.1} parent=1 // pred_fallthru
      _
    // Predicated region
    $region6: #{tpu_custom_call.1} parent=1 // pred_check
      _
    $region7: #{tpu_custom_call.1} parent=1 // pred_check_branch
      %25 = sbr.rel (0) target = $region9
    $region8: #{tpu_custom_call.1} parent=1 // pred_region
      %s27 = ssub.s32 1024, 1024
      %28 = vsyncadd [#allocation6], %s27
      %s30 = sshll.u32 [#allocation5], 4
      %s31 = int_to_ptr.vmem [resolvable:$true] %s30
      %33 = dma.hbm_to_vmem [thread:$0]  %s1, 1024, %s31, [#allocation6]
    $region9: #{tpu_custom_call.1} parent=1 // pred_fallthru
      _
    // Predicated region
    $region10: #{tpu_custom_call.1} parent=1 // pred_check
      _
    $region11: #{tpu_custom_call.1} parent=1 // pred_check_branch
      %35 = sbr.rel (0) target = $region13
    $region12: #{tpu_custom_call.1} parent=1 // pred_region
      %s37 = ssub.s32 1024, 1024
      %38 = vsyncadd [#allocation6], %s37
      %s40 = sshll.u32 [#allocation7], 4
      %s41 = int_to_ptr.vmem [resolvable:$true] %s40
      %43 = dma.hbm_to_vmem [thread:$0]  %s2, 1024, %s41, [#allocation6]
    $region13: #{tpu_custom_call.1} parent=1 // pred_fallthru
      _
    // Predicated region
    $region14: #{tpu_custom_call.1} parent=1 // pred_check
      _
    $region15: #{tpu_custom_call.1} parent=1 // pred_check_branch
      %45 = sbr.rel (0) target = $region17
    $region16: #{tpu_custom_call.1} parent=1 // pred_region
      %s47 = ssub.s32 24000, 24000
      %48 = vsyncadd [#allocation9], %s47
      %s49 = sshll.u32 [#allocation8], 4
      %s50 = int_to_ptr.vmem [resolvable:$true] %s49
      %55 = dma.hbm_to_vmem [thread:$0]  %s3, 24000, %s50, [#allocation9], 64, 64, 4
    $region17: #{tpu_custom_call.1} parent=1 // pred_fallthru
      _
    // Predicated region
    $region18: #{tpu_custom_call.1} parent=1 // pred_check
      _
    $region19: #{tpu_custom_call.1} parent=1 // pred_check_branch
      %57 = sbr.rel (0) target = $region21
    $region20: #{tpu_custom_call.1} parent=1 // pred_region
      %s59 = ssub.s32 16, 16
      %60 = vsyncadd [#allocation9], %s59
      %s62 = sshll.u32 [#allocation10], 4
      %s63 = int_to_ptr.vmem [resolvable:$true] %s62
      %65 = dma.hbm_to_vmem [thread:$0]  %s4, 16, %s63, [#allocation9]
    $region21: #{tpu_custom_call.1} parent=1 // pred_fallthru
      _
    // Predicated region
    $region22: #{tpu_custom_call.1} parent=1 // pred_check
      _
    $region23: #{tpu_custom_call.1} parent=1 // pred_check_branch
      %67 = sbr.rel (0) target = $region25
    $region24: #{tpu_custom_call.1} parent=1 // pred_region
      %68 = dma.done [#allocation3], 1024
    $region25: #{tpu_custom_call.1} parent=1 // pred_fallthru
      _
    // Predicated region
    $region26: #{tpu_custom_call.1} parent=1 // pred_check
      _
    $region27: #{tpu_custom_call.1} parent=1 // pred_check_branch
      %70 = sbr.rel (0) target = $region29
    $region28: #{tpu_custom_call.1} parent=1 // pred_region
      %71 = dma.done [#allocation6], 1024
    $region29: #{tpu_custom_call.1} parent=1 // pred_fallthru
      _
    // Predicated region
    $region30: #{tpu_custom_call.1} parent=1 // pred_check
      _
    $region31: #{tpu_custom_call.1} parent=1 // pred_check_branch
      %73 = sbr.rel (0) target = $region33
    $region32: #{tpu_custom_call.1} parent=1 // pred_region
      %74 = dma.done [#allocation6], 1024
    $region33: #{tpu_custom_call.1} parent=1 // pred_fallthru
      _
    // Predicated region
    $region34: #{tpu_custom_call.1} parent=1 // pred_check
      _
    $region35: #{tpu_custom_call.1} parent=1 // pred_check_branch
      %76 = sbr.rel (0) target = $region37
    $region36: #{tpu_custom_call.1} parent=1 // pred_region
      %77 = dma.done [#allocation9], 24000
    $region37: #{tpu_custom_call.1} parent=1 // pred_fallthru
      _
    // Predicated region
    $region38: #{tpu_custom_call.1} parent=1 // pred_check
      _
    $region39: #{tpu_custom_call.1} parent=1 // pred_check_branch
      %79 = sbr.rel (0) target = $region41
    $region40: #{tpu_custom_call.1} parent=1 // pred_region
      %80 = dma.done [#allocation9], 16
    $region41: #{tpu_custom_call.1} parent=1 // pred_fallthru
      _
    %v82 = vld [vmem:[#allocation2] sm:$0xff]
    %v83 = vld [vmem:[#allocation2 + $0x8] sm:$0xff]
    %v84 = vld [vmem:[#allocation2 + $0x10] sm:$0xff]
    %v85 = vld [vmem:[#allocation2 + $0x18] sm:$0xff]
    %v86 = vld [vmem:[#allocation2 + $0x20] sm:$0xff]
    %v87 = vld [vmem:[#allocation2 + $0x28] sm:$0xff]
    %v88 = vld [vmem:[#allocation2 + $0x30] sm:$0xff]
    %v89 = vld [vmem:[#allocation2 + $0x38] sm:$0xff]
    %v90 = vpack.c.bf16 %v82, %v82
    %v91 = vpack.c.bf16 %v83, %v83
    %v92 = vpack.c.bf16 %v84, %v84
    %v93 = vpack.c.bf16 %v85, %v85
    %v94 = vpack.c.bf16 %v86, %v86
    %v95 = vpack.c.bf16 %v87, %v87
    %v96 = vpack.c.bf16 %v88, %v88
    %v97 = vpack.c.bf16 %v89, %v89
    %v98 = vld [vmem:[#allocation8] sm:$0xf]
    %v99 = vld [vmem:[#allocation8 + $0x4] sm:$0xf]
    %v100 = vld [vmem:[#allocation8 + $0x8] sm:$0xf]
    %v101 = vld [vmem:[#allocation8 + $0xc] sm:$0xf]
    %v102 = vld [vmem:[#allocation8 + $0x10] sm:$0xf]
    %v103 = vld [vmem:[#allocation8 + $0x14] sm:$0xf]
    %v104 = vld [vmem:[#allocation8 + $0x18] sm:$0xf]
    %v105 = vld [vmem:[#allocation8 + $0x1c] sm:$0xf]
    %v106 = vld [vmem:[#allocation8 + $0x20] sm:$0xf]
    %v107 = vld [vmem:[#allocation8 + $0x24] sm:$0xf]
    %v108 = vld [vmem:[#allocation8 + $0x28] sm:$0xf]
    %v109 = vld [vmem:[#allocation8 + $0x2c] sm:$0xf]
    %v110 = vld [vmem:[#allocation8 + $0x30] sm:$0xf]
    %v111 = vld [vmem:[#allocation8 + $0x34] sm:$0xf]
    %v112 = vld [vmem:[#allocation8 + $0x38] sm:$0xf]
    %v113 = vld [vmem:[#allocation8 + $0x3c] sm:$0xf]
    %v114 = vld [vmem:[#allocation8 + $0x40] sm:$0xf]
    %v115 = vld [vmem:[#allocation8 + $0x44] sm:$0xf]
    %v116 = vld [vmem:[#allocation8 + $0x48] sm:$0xf]
    %v117 = vld [vmem:[#allocation8 + $0x4c] sm:$0xf]
    %v118 = vld [vmem:[#allocation8 + $0x50] sm:$0xf]
    %v119 = vld [vmem:[#allocation8 + $0x54] sm:$0xf]
    %v120 = vld [vmem:[#allocation8 + $0x58] sm:$0xf]
    %v121 = vld [vmem:[#allocation8 + $0x5c] sm:$0xf]
    %v122 = vld [vmem:[#allocation8 + $0x60] sm:$0xf]
    %v123 = vld [vmem:[#allocation8 + $0x64] sm:$0xf]
    %v124 = vld [vmem:[#allocation8 + $0x68] sm:$0xf]
    %v125 = vld [vmem:[#allocation8 + $0x6c] sm:$0xf]
    %v126 = vld [vmem:[#allocation8 + $0x70] sm:$0xf]
    %v127 = vld [vmem:[#allocation8 + $0x74] sm:$0xf]
    %v128 = vld [vmem:[#allocation8 + $0x78] sm:$0xf]
    %v129 = vld [vmem:[#allocation8 + $0x7c] sm:$0xf]
    %v130 = vld [vmem:[#allocation8 + $0x80] sm:$0xf]
    %v131 = vld [vmem:[#allocation8 + $0x84] sm:$0xf]
    %v132 = vld [vmem:[#allocation8 + $0x88] sm:$0xf]
    %v133 = vld [vmem:[#allocation8 + $0x8c] sm:$0xf]
    %v134 = vld [vmem:[#allocation8 + $0x90] sm:$0xf]
    %v135 = vld [vmem:[#allocation8 + $0x94] sm:$0xf]
    %v136 = vld [vmem:[#allocation8 + $0x98] sm:$0xf]
    %v137 = vld [vmem:[#allocation8 + $0x9c] sm:$0xf]
    %v138 = vld [vmem:[#allocation8 + $0xa0] sm:$0xf]
    %v139 = vld [vmem:[#allocation8 + $0xa4] sm:$0xf]
    %v140 = vld [vmem:[#allocation8 + $0xa8] sm:$0xf]
    %v141 = vld [vmem:[#allocation8 + $0xac] sm:$0xf]
    %v142 = vld [vmem:[#allocation8 + $0xb0] sm:$0xf]
    %v143 = vld [vmem:[#allocation8 + $0xb4] sm:$0xf]
    %v144 = vld [vmem:[#allocation8 + $0xb8] sm:$0xf]
    %v145 = vld [vmem:[#allocation8 + $0xbc] sm:$0xf]
    %v146 = vld [vmem:[#allocation8 + $0xc0] sm:$0xf]
    %v147 = vld [vmem:[#allocation8 + $0xc4] sm:$0xf]
    %v148 = vld [vmem:[#allocation8 + $0xc8] sm:$0xf]
    %v149 = vld [vmem:[#allocation8 + $0xcc] sm:$0xf]
    %v150 = vld [vmem:[#allocation8 + $0xd0] sm:$0xf]
    %v151 = vld [vmem:[#allocation8 + $0xd4] sm:$0xf]
    %v152 = vld [vmem:[#allocation8 + $0xd8] sm:$0xf]
    %v153 = vld [vmem:[#allocation8 + $0xdc] sm:$0xf]
    %v154 = vld [vmem:[#allocation8 + $0xe0] sm:$0xf]
    %v155 = vld [vmem:[#allocation8 + $0xe4] sm:$0xf]
    %v156 = vld [vmem:[#allocation8 + $0xe8] sm:$0xf]
    %v157 = vld [vmem:[#allocation8 + $0xec] sm:$0xf]
    %v158 = vld [vmem:[#allocation8 + $0xf0] sm:$0xf]
    %v159 = vld [vmem:[#allocation8 + $0xf4] sm:$0xf]
    %v160 = vld [vmem:[#allocation8 + $0xf8] sm:$0xf]
    %v161 = vld [vmem:[#allocation8 + $0xfc] sm:$0xf]
    %v162 = vld [vmem:[#allocation8 + $0x100] sm:$0xf]
    %v163 = vld [vmem:[#allocation8 + $0x104] sm:$0xf]
    %v164 = vld [vmem:[#allocation8 + $0x108] sm:$0xf]
    %v165 = vld [vmem:[#allocation8 + $0x10c] sm:$0xf]
    %v166 = vld [vmem:[#allocation8 + $0x110] sm:$0xf]
    %v167 = vld [vmem:[#allocation8 + $0x114] sm:$0xf]
    %v168 = vld [vmem:[#allocation8 + $0x118] sm:$0xf]
    %v169 = vld [vmem:[#allocation8 + $0x11c] sm:$0xf]
    %v170 = vld [vmem:[#allocation8 + $0x120] sm:$0xf]
    %v171 = vld [vmem:[#allocation8 + $0x124] sm:$0xf]
    %v172 = vld [vmem:[#allocation8 + $0x128] sm:$0xf]
    %v173 = vld [vmem:[#allocation8 + $0x12c] sm:$0xf]
    %v174 = vld [vmem:[#allocation8 + $0x130] sm:$0xf]
    %v175 = vld [vmem:[#allocation8 + $0x134] sm:$0xf]
    %v176 = vld [vmem:[#allocation8 + $0x138] sm:$0xf]
    %v177 = vld [vmem:[#allocation8 + $0x13c] sm:$0xf]
    %v178 = vld [vmem:[#allocation8 + $0x140] sm:$0xf]
    %v179 = vld [vmem:[#allocation8 + $0x144] sm:$0xf]
    %v180 = vld [vmem:[#allocation8 + $0x148] sm:$0xf]
    %v181 = vld [vmem:[#allocation8 + $0x14c] sm:$0xf]
    %v182 = vld [vmem:[#allocation8 + $0x150] sm:$0xf]
    %v183 = vld [vmem:[#allocation8 + $0x154] sm:$0xf]
    %v184 = vld [vmem:[#allocation8 + $0x158] sm:$0xf]
    %v185 = vld [vmem:[#allocation8 + $0x15c] sm:$0xf]
    %v186 = vld [vmem:[#allocation8 + $0x160] sm:$0xf]
    %v187 = vld [vmem:[#allocation8 + $0x164] sm:$0xf]
    %v188 = vld [vmem:[#allocation8 + $0x168] sm:$0xf]
    %v189 = vld [vmem:[#allocation8 + $0x16c] sm:$0xf]
    %v190 = vld [vmem:[#allocation8 + $0x170] sm:$0xf]
    %v191 = vld [vmem:[#allocation8 + $0x174] sm:$0xf]
    %v192 = vld [vmem:[#allocation8 + $0x178] sm:$0xf]
    %v193 = vld [vmem:[#allocation8 + $0x17c] sm:$0xf]
    %v194 = vld [vmem:[#allocation8 + $0x180] sm:$0xf]
    %v195 = vld [vmem:[#allocation8 + $0x184] sm:$0xf]
    %v196 = vld [vmem:[#allocation8 + $0x188] sm:$0xf]
    %v197 = vld [vmem:[#allocation8 + $0x18c] sm:$0xf]
    %v198 = vld [vmem:[#allocation8 + $0x190] sm:$0xf]
    %v199 = vld [vmem:[#allocation8 + $0x194] sm:$0xf]
    %v200 = vld [vmem:[#allocation8 + $0x198] sm:$0xf]
    %v201 = vld [vmem:[#allocation8 + $0x19c] sm:$0xf]
    %v202 = vld [vmem:[#allocation8 + $0x1a0] sm:$0xf]
    %v203 = vld [vmem:[#allocation8 + $0x1a4] sm:$0xf]
    %v204 = vld [vmem:[#allocation8 + $0x1a8] sm:$0xf]
    %v205 = vld [vmem:[#allocation8 + $0x1ac] sm:$0xf]
    %v206 = vld [vmem:[#allocation8 + $0x1b0] sm:$0xf]
    %v207 = vld [vmem:[#allocation8 + $0x1b4] sm:$0xf]
    %v208 = vld [vmem:[#allocation8 + $0x1b8] sm:$0xf]
    %v209 = vld [vmem:[#allocation8 + $0x1bc] sm:$0xf]
    %v210 = vld [vmem:[#allocation8 + $0x1c0] sm:$0xf]
    %v211 = vld [vmem:[#allocation8 + $0x1c4] sm:$0xf]
    %v212 = vld [vmem:[#allocation8 + $0x1c8] sm:$0xf]
    %v213 = vld [vmem:[#allocation8 + $0x1cc] sm:$0xf]
    %v214 = vld [vmem:[#allocation8 + $0x1d0] sm:$0xf]
    %v215 = vld [vmem:[#allocation8 + $0x1d4] sm:$0xf]
    %v216 = vld [vmem:[#allocation8 + $0x1d8] sm:$0xf]
    %v217 = vld [vmem:[#allocation8 + $0x1dc] sm:$0xf]
    %v218 = vld [vmem:[#allocation8 + $0x1e0] sm:$0xf]
    %v219 = vld [vmem:[#allocation8 + $0x1e4] sm:$0xf]
    %v220 = vld [vmem:[#allocation8 + $0x1e8] sm:$0xf]
    %v221 = vld [vmem:[#allocation8 + $0x1ec] sm:$0xf]
    %v222 = vld [vmem:[#allocation8 + $0x1f0] sm:$0xf]
    %v223 = vld [vmem:[#allocation5] sm:$0xff]
    %v224 = vld [vmem:[#allocation5 + $0x8] sm:$0xff]
    %v225 = vld [vmem:[#allocation5 + $0x10] sm:$0xff]
    %v226 = vld [vmem:[#allocation5 + $0x18] sm:$0xff]
    %v227 = vld [vmem:[#allocation5 + $0x20] sm:$0xff]
    %v228 = vld [vmem:[#allocation5 + $0x28] sm:$0xff]
    %v229 = vld [vmem:[#allocation5 + $0x30] sm:$0xff]
    %v230 = vld [vmem:[#allocation5 + $0x38] sm:$0xff]
    %v231 = vpack.c.bf16 %v223, %v223
    %v232 = vpack.c.bf16 %v224, %v224
    %v233 = vpack.c.bf16 %v225, %v225
    %v234 = vpack.c.bf16 %v226, %v226
    %v235 = vpack.c.bf16 %v227, %v227
    %v236 = vpack.c.bf16 %v228, %v228
    %v237 = vpack.c.bf16 %v229, %v229
    %v238 = vpack.c.bf16 %v230, %v230
    %s239 = scalar_lea.vmem [#allocation8], 500
    %v240 = vld [vmem:[%s239] sm:$0xf]
    %v241 = vld [vmem:[%s239 + $0x4] sm:$0xf]
    %v242 = vld [vmem:[%s239 + $0x8] sm:$0xf]
    %v243 = vld [vmem:[%s239 + $0xc] sm:$0xf]
    %v244 = vld [vmem:[%s239 + $0x10] sm:$0xf]
    %v245 = vld [vmem:[%s239 + $0x14] sm:$0xf]
    %v246 = vld [vmem:[%s239 + $0x18] sm:$0xf]
    %v247 = vld [vmem:[%s239 + $0x1c] sm:$0xf]
    %v248 = vld [vmem:[%s239 + $0x20] sm:$0xf]
    %v249 = vld [vmem:[%s239 + $0x24] sm:$0xf]
    %v250 = vld [vmem:[%s239 + $0x28] sm:$0xf]
    %v251 = vld [vmem:[%s239 + $0x2c] sm:$0xf]
    %v252 = vld [vmem:[%s239 + $0x30] sm:$0xf]
    %v253 = vld [vmem:[%s239 + $0x34] sm:$0xf]
    %v254 = vld [vmem:[%s239 + $0x38] sm:$0xf]
    %v255 = vld [vmem:[%s239 + $0x3c] sm:$0xf]
    %v256 = vld [vmem:[%s239 + $0x40] sm:$0xf]
    %v257 = vld [vmem:[%s239 + $0x44] sm:$0xf]
    %v258 = vld [vmem:[%s239 + $0x48] sm:$0xf]
    %v259 = vld [vmem:[%s239 + $0x4c] sm:$0xf]
    %v260 = vld [vmem:[%s239 + $0x50] sm:$0xf]
    %v261 = vld [vmem:[%s239 + $0x54] sm:$0xf]
    %v262 = vld [vmem:[%s239 + $0x58] sm:$0xf]
    %v263 = vld [vmem:[%s239 + $0x5c] sm:$0xf]
    %v264 = vld [vmem:[%s239 + $0x60] sm:$0xf]
    %v265 = vld [vmem:[%s239 + $0x64] sm:$0xf]
    %v266 = vld [vmem:[%s239 + $0x68] sm:$0xf]
    %v267 = vld [vmem:[%s239 + $0x6c] sm:$0xf]
    %v268 = vld [vmem:[%s239 + $0x70] sm:$0xf]
    %v269 = vld [vmem:[%s239 + $0x74] sm:$0xf]
    %v270 = vld [vmem:[%s239 + $0x78] sm:$0xf]
    %v271 = vld [vmem:[%s239 + $0x7c] sm:$0xf]
    %v272 = vld [vmem:[%s239 + $0x80] sm:$0xf]
    %v273 = vld [vmem:[%s239 + $0x84] sm:$0xf]
    %v274 = vld [vmem:[%s239 + $0x88] sm:$0xf]
    %v275 = vld [vmem:[%s239 + $0x8c] sm:$0xf]
    %v276 = vld [vmem:[%s239 + $0x90] sm:$0xf]
    %v277 = vld [vmem:[%s239 + $0x94] sm:$0xf]
    %v278 = vld [vmem:[%s239 + $0x98] sm:$0xf]
    %v279 = vld [vmem:[%s239 + $0x9c] sm:$0xf]
    %v280 = vld [vmem:[%s239 + $0xa0] sm:$0xf]
    %v281 = vld [vmem:[%s239 + $0xa4] sm:$0xf]
    %v282 = vld [vmem:[%s239 + $0xa8] sm:$0xf]
    %v283 = vld [vmem:[%s239 + $0xac] sm:$0xf]
    %v284 = vld [vmem:[%s239 + $0xb0] sm:$0xf]
    %v285 = vld [vmem:[%s239 + $0xb4] sm:$0xf]
    %v286 = vld [vmem:[%s239 + $0xb8] sm:$0xf]
    %v287 = vld [vmem:[%s239 + $0xbc] sm:$0xf]
    %v288 = vld [vmem:[%s239 + $0xc0] sm:$0xf]
    %v289 = vld [vmem:[%s239 + $0xc4] sm:$0xf]
    %v290 = vld [vmem:[%s239 + $0xc8] sm:$0xf]
    %v291 = vld [vmem:[%s239 + $0xcc] sm:$0xf]
    %v292 = vld [vmem:[%s239 + $0xd0] sm:$0xf]
    %v293 = vld [vmem:[%s239 + $0xd4] sm:$0xf]
    %v294 = vld [vmem:[%s239 + $0xd8] sm:$0xf]
    %v295 = vld [vmem:[%s239 + $0xdc] sm:$0xf]
    %v296 = vld [vmem:[%s239 + $0xe0] sm:$0xf]
    %v297 = vld [vmem:[%s239 + $0xe4] sm:$0xf]
    %v298 = vld [vmem:[%s239 + $0xe8] sm:$0xf]
    %v299 = vld [vmem:[%s239 + $0xec] sm:$0xf]
    %v300 = vld [vmem:[%s239 + $0xf0] sm:$0xf]
    %v301 = vld [vmem:[%s239 + $0xf4] sm:$0xf]
    %v302 = vld [vmem:[%s239 + $0xf8] sm:$0xf]
    %v303 = vld [vmem:[%s239 + $0xfc] sm:$0xf]
    %v304 = vld [vmem:[%s239 + $0x100] sm:$0xf]
    %v305 = vld [vmem:[%s239 + $0x104] sm:$0xf]
    %v306 = vld [vmem:[%s239 + $0x108] sm:$0xf]
    %v307 = vld [vmem:[%s239 + $0x10c] sm:$0xf]
    %v308 = vld [vmem:[%s239 + $0x110] sm:$0xf]
    %v309 = vld [vmem:[%s239 + $0x114] sm:$0xf]
    %v310 = vld [vmem:[%s239 + $0x118] sm:$0xf]
    %v311 = vld [vmem:[%s239 + $0x11c] sm:$0xf]
    %v312 = vld [vmem:[%s239 + $0x120] sm:$0xf]
    %v313 = vld [vmem:[%s239 + $0x124] sm:$0xf]
    %v314 = vld [vmem:[%s239 + $0x128] sm:$0xf]
    %v315 = vld [vmem:[%s239 + $0x12c] sm:$0xf]
    %v316 = vld [vmem:[%s239 + $0x130] sm:$0xf]
    %v317 = vld [vmem:[%s239 + $0x134] sm:$0xf]
    %v318 = vld [vmem:[%s239 + $0x138] sm:$0xf]
    %v319 = vld [vmem:[%s239 + $0x13c] sm:$0xf]
    %v320 = vld [vmem:[%s239 + $0x140] sm:$0xf]
    %v321 = vld [vmem:[%s239 + $0x144] sm:$0xf]
    %v322 = vld [vmem:[%s239 + $0x148] sm:$0xf]
    %v323 = vld [vmem:[%s239 + $0x14c] sm:$0xf]
    %v324 = vld [vmem:[%s239 + $0x150] sm:$0xf]
    %v325 = vld [vmem:[%s239 + $0x154] sm:$0xf]
    %v326 = vld [vmem:[%s239 + $0x158] sm:$0xf]
    %v327 = vld [vmem:[%s239 + $0x15c] sm:$0xf]
    %v328 = vld [vmem:[%s239 + $0x160] sm:$0xf]
    %v329 = vld [vmem:[%s239 + $0x164] sm:$0xf]
    %v330 = vld [vmem:[%s239 + $0x168] sm:$0xf]
    %v331 = vld [vmem:[%s239 + $0x16c] sm:$0xf]
    %v332 = vld [vmem:[%s239 + $0x170] sm:$0xf]
    %v333 = vld [vmem:[%s239 + $0x174] sm:$0xf]
    %v334 = vld [vmem:[%s239 + $0x178] sm:$0xf]
    %v335 = vld [vmem:[%s239 + $0x17c] sm:$0xf]
    %v336 = vld [vmem:[%s239 + $0x180] sm:$0xf]
    %v337 = vld [vmem:[%s239 + $0x184] sm:$0xf]
    %v338 = vld [vmem:[%s239 + $0x188] sm:$0xf]
    %v339 = vld [vmem:[%s239 + $0x18c] sm:$0xf]
    %v340 = vld [vmem:[%s239 + $0x190] sm:$0xf]
    %v341 = vld [vmem:[%s239 + $0x194] sm:$0xf]
    %v342 = vld [vmem:[%s239 + $0x198] sm:$0xf]
    %v343 = vld [vmem:[%s239 + $0x19c] sm:$0xf]
    %v344 = vld [vmem:[%s239 + $0x1a0] sm:$0xf]
    %v345 = vld [vmem:[%s239 + $0x1a4] sm:$0xf]
    %v346 = vld [vmem:[%s239 + $0x1a8] sm:$0xf]
    %v347 = vld [vmem:[%s239 + $0x1ac] sm:$0xf]
    %v348 = vld [vmem:[%s239 + $0x1b0] sm:$0xf]
    %v349 = vld [vmem:[%s239 + $0x1b4] sm:$0xf]
    %v350 = vld [vmem:[%s239 + $0x1b8] sm:$0xf]
    %v351 = vld [vmem:[%s239 + $0x1bc] sm:$0xf]
    %v352 = vld [vmem:[%s239 + $0x1c0] sm:$0xf]
    %v353 = vld [vmem:[%s239 + $0x1c4] sm:$0xf]
    %v354 = vld [vmem:[%s239 + $0x1c8] sm:$0xf]
    %v355 = vld [vmem:[%s239 + $0x1cc] sm:$0xf]
    %v356 = vld [vmem:[%s239 + $0x1d0] sm:$0xf]
    %v357 = vld [vmem:[%s239 + $0x1d4] sm:$0xf]
    %v358 = vld [vmem:[%s239 + $0x1d8] sm:$0xf]
    %v359 = vld [vmem:[%s239 + $0x1dc] sm:$0xf]
    %v360 = vld [vmem:[%s239 + $0x1e0] sm:$0xf]
    %v361 = vld [vmem:[%s239 + $0x1e4] sm:$0xf]
    %v362 = vld [vmem:[%s239 + $0x1e8] sm:$0xf]
    %v363 = vld [vmem:[%s239 + $0x1ec] sm:$0xf]
    %v364 = vld [vmem:[%s239 + $0x1f0] sm:$0xf]
    %v490 = vunpack.c.l.b16 %v240
    %v491 = vunpack.c.l.b16 %v241
    %v492 = vunpack.c.l.b16 %v242
    %v493 = vunpack.c.l.b16 %v243
    %v494 = vunpack.c.l.b16 %v244
    %v495 = vunpack.c.l.b16 %v245
    %v496 = vunpack.c.l.b16 %v246
    %v497 = vunpack.c.l.b16 %v247
    %v498 = vunpack.c.l.b16 %v248
    %v499 = vunpack.c.l.b16 %v249
    %v500 = vunpack.c.l.b16 %v250
    %v501 = vunpack.c.l.b16 %v251
    %v502 = vunpack.c.l.b16 %v252
    %v503 = vunpack.c.l.b16 %v253
    %v504 = vunpack.c.l.b16 %v254
    %v505 = vunpack.c.l.b16 %v255
    %v506 = vunpack.c.l.b16 %v256
    %v507 = vunpack.c.l.b16 %v257
    %v508 = vunpack.c.l.b16 %v258
    %v509 = vunpack.c.l.b16 %v259
    %v510 = vunpack.c.l.b16 %v260
    %v511 = vunpack.c.l.b16 %v261
    %v512 = vunpack.c.l.b16 %v262
    %v513 = vunpack.c.l.b16 %v263
    %v514 = vunpack.c.l.b16 %v264
    %v515 = vunpack.c.l.b16 %v265
    %v516 = vunpack.c.l.b16 %v266
    %v517 = vunpack.c.l.b16 %v267
    %v518 = vunpack.c.l.b16 %v268
    %v519 = vunpack.c.l.b16 %v269
    %v520 = vunpack.c.l.b16 %v270
    %v521 = vunpack.c.l.b16 %v271
    %v522 = vunpack.c.l.b16 %v272
    %v523 = vunpack.c.l.b16 %v273
    %v524 = vunpack.c.l.b16 %v274
    %v525 = vunpack.c.l.b16 %v275
    %v526 = vunpack.c.l.b16 %v276
    %v527 = vunpack.c.l.b16 %v277
    %v528 = vunpack.c.l.b16 %v278
    %v529 = vunpack.c.l.b16 %v279
    %v530 = vunpack.c.l.b16 %v280
    %v531 = vunpack.c.l.b16 %v281
    %v532 = vunpack.c.l.b16 %v282
    %v533 = vunpack.c.l.b16 %v283
    %v534 = vunpack.c.l.b16 %v284
    %v535 = vunpack.c.l.b16 %v285
    %v536 = vunpack.c.l.b16 %v286
    %v537 = vunpack.c.l.b16 %v287
    %v538 = vunpack.c.l.b16 %v288
    %v539 = vunpack.c.l.b16 %v289
    %v540 = vunpack.c.l.b16 %v290
    %v541 = vunpack.c.l.b16 %v291
    %v542 = vunpack.c.l.b16 %v292
    %v543 = vunpack.c.l.b16 %v293
    %v544 = vunpack.c.l.b16 %v294
    %v545 = vunpack.c.l.b16 %v295
    %v546 = vunpack.c.l.b16 %v296
    %v547 = vunpack.c.l.b16 %v297
    %v548 = vunpack.c.l.b16 %v298
    %v549 = vunpack.c.l.b16 %v299
    %v550 = vunpack.c.l.b16 %v300
    %v551 = vunpack.c.l.b16 %v301
    %v552 = vunpack.c.l.b16 %v302
    %v553 = vunpack.c.l.b16 %v303
    %v554 = vunpack.c.l.b16 %v304
    %v555 = vunpack.c.l.b16 %v305
    %v556 = vunpack.c.l.b16 %v306
    %v557 = vunpack.c.l.b16 %v307
    %v558 = vunpack.c.l.b16 %v308
    %v559 = vunpack.c.l.b16 %v309
    %v560 = vunpack.c.l.b16 %v310
    %v561 = vunpack.c.l.b16 %v311
    %v562 = vunpack.c.l.b16 %v312
    %v563 = vunpack.c.l.b16 %v313
    %v564 = vunpack.c.l.b16 %v314
    %v565 = vunpack.c.l.b16 %v315
    %v566 = vunpack.c.l.b16 %v316
    %v567 = vunpack.c.l.b16 %v317
    %v568 = vunpack.c.l.b16 %v318
    %v569 = vunpack.c.l.b16 %v319
    %v570 = vunpack.c.l.b16 %v320
    %v571 = vunpack.c.l.b16 %v321
    %v572 = vunpack.c.l.b16 %v322
    %v573 = vunpack.c.l.b16 %v323
    %v574 = vunpack.c.l.b16 %v324
    %v575 = vunpack.c.l.b16 %v325
    %v576 = vunpack.c.l.b16 %v326
    %v577 = vunpack.c.l.b16 %v327
    %v578 = vunpack.c.l.b16 %v328
    %v579 = vunpack.c.l.b16 %v329
    %v580 = vunpack.c.l.b16 %v330
    %v581 = vunpack.c.l.b16 %v331
    %v582 = vunpack.c.l.b16 %v332
    %v583 = vunpack.c.l.b16 %v333
    %v584 = vunpack.c.l.b16 %v334
    %v585 = vunpack.c.l.b16 %v335
    %v586 = vunpack.c.l.b16 %v336
    %v587 = vunpack.c.l.b16 %v337
    %v588 = vunpack.c.l.b16 %v338
    %v589 = vunpack.c.l.b16 %v339
    %v590 = vunpack.c.l.b16 %v340
    %v591 = vunpack.c.l.b16 %v341
    %v592 = vunpack.c.l.b16 %v342
    %v593 = vunpack.c.l.b16 %v343
    %v594 = vunpack.c.l.b16 %v344
    %v595 = vunpack.c.l.b16 %v345
    %v596 = vunpack.c.l.b16 %v346
    %v597 = vunpack.c.l.b16 %v347
    %v598 = vunpack.c.l.b16 %v348
    %v599 = vunpack.c.l.b16 %v349
    %v600 = vunpack.c.l.b16 %v350
    %v601 = vunpack.c.l.b16 %v351
    %v602 = vunpack.c.l.b16 %v352
    %v603 = vunpack.c.l.b16 %v353
    %v604 = vunpack.c.l.b16 %v354
    %v605 = vunpack.c.l.b16 %v355
    %v606 = vunpack.c.l.b16 %v356
    %v607 = vunpack.c.l.b16 %v357
    %v608 = vunpack.c.l.b16 %v358
    %v609 = vunpack.c.l.b16 %v359
    %v610 = vunpack.c.l.b16 %v360
    %v611 = vunpack.c.l.b16 %v361
    %v612 = vunpack.c.l.b16 %v362
    %v613 = vunpack.c.l.b16 %v363
    %v614 = vunpack.c.l.b16 %v364
    %v615 = vpack.c.b16 %v491, %v490
    %v616 = vpack.c.b16 %v493, %v492
    %v617 = vpack.c.b16 %v495, %v494
    %v618 = vpack.c.b16 %v497, %v496
    %v619 = vpack.c.b16 %v499, %v498
    %v620 = vpack.c.b16 %v501, %v500
    %v621 = vpack.c.b16 %v503, %v502
    %v622 = vpack.c.b16 %v505, %v504
    %v623 = vpack.c.b16 %v507, %v506
    %v624 = vpack.c.b16 %v509, %v508
    %v625 = vpack.c.b16 %v511, %v510
    %v626 = vpack.c.b16 %v513, %v512
    %v627 = vpack.c.b16 %v515, %v514
    %v628 = vpack.c.b16 %v517, %v516
    %v629 = vpack.c.b16 %v519, %v518
    %v630 = vpack.c.b16 %v521, %v520
    %v631 = vpack.c.b16 %v523, %v522
    %v632 = vpack.c.b16 %v525, %v524
    %v633 = vpack.c.b16 %v527, %v526
    %v634 = vpack.c.b16 %v529, %v528
    %v635 = vpack.c.b16 %v531, %v530
    %v636 = vpack.c.b16 %v533, %v532
    %v637 = vpack.c.b16 %v535, %v534
    %v638 = vpack.c.b16 %v537, %v536
    %v639 = vpack.c.b16 %v539, %v538
    %v640 = vpack.c.b16 %v541, %v540
    %v641 = vpack.c.b16 %v543, %v542
    %v642 = vpack.c.b16 %v545, %v544
    %v643 = vpack.c.b16 %v547, %v546
    %v644 = vpack.c.b16 %v549, %v548
    %v645 = vpack.c.b16 %v551, %v550
    %v646 = vpack.c.b16 %v553, %v552
    %v647 = vpack.c.b16 %v555, %v554
    %v648 = vpack.c.b16 %v557, %v556
    %v649 = vpack.c.b16 %v559, %v558
    %v650 = vpack.c.b16 %v561, %v560
    %v651 = vpack.c.b16 %v563, %v562
    %v652 = vpack.c.b16 %v565, %v564
    %v653 = vpack.c.b16 %v567, %v566
    %v654 = vpack.c.b16 %v569, %v568
    %v655 = vpack.c.b16 %v571, %v570
    %v656 = vpack.c.b16 %v573, %v572
    %v657 = vpack.c.b16 %v575, %v574
    %v658 = vpack.c.b16 %v577, %v576
    %v659 = vpack.c.b16 %v579, %v578
    %v660 = vpack.c.b16 %v581, %v580
    %v661 = vpack.c.b16 %v583, %v582
    %v662 = vpack.c.b16 %v585, %v584
    %v663 = vpack.c.b16 %v587, %v586
    %v664 = vpack.c.b16 %v589, %v588
    %v665 = vpack.c.b16 %v591, %v590
    %v666 = vpack.c.b16 %v593, %v592
    %v667 = vpack.c.b16 %v595, %v594
    %v668 = vpack.c.b16 %v597, %v596
    %v669 = vpack.c.b16 %v599, %v598
    %v670 = vpack.c.b16 %v601, %v600
    %v671 = vpack.c.b16 %v603, %v602
    %v672 = vpack.c.b16 %v605, %v604
    %v673 = vpack.c.b16 %v607, %v606
    %v674 = vpack.c.b16 %v609, %v608
    %v675 = vpack.c.b16 %v611, %v610
    %v676 = vpack.c.b16 %v613, %v612
    %v677 = vpack.c.b16 %v614, %v614
    %vm740 = vcmask 850944
    %v742 = vsel %vm740, %v238, 0
    %vm744 = vcmask 1043456
    %v746 = vsel %vm744, %v677, 0
    %748 = vmatprep.subr.bf16.mxu0 0
    %749 = vmatpush1.bf16.msra.mxu0 %v615
    %750 = vmatprep.subr.bf16.mxu0 0
    %751 = vmatpush1.bf16.msra.mxu0 %v616
    %752 = vmatprep.subr.bf16.mxu0 0
    %753 = vmatpush1.bf16.msra.mxu0 %v617
    %754 = vmatprep.subr.bf16.mxu0 0
    %755 = vmatpush1.bf16.msra.mxu0 %v618
    %756 = vmatprep.subr.bf16.mxu0 0
    %757 = vmatpush1.bf16.msra.mxu0 %v619
    %758 = vmatprep.subr.bf16.mxu0 0
    %759 = vmatpush1.bf16.msra.mxu0 %v620
    %760 = vmatprep.subr.bf16.mxu0 0
    %761 = vmatpush1.bf16.msra.mxu0 %v621
    %762 = vmatprep.subr.bf16.mxu0 0
    %763 = vmatpush1.bf16.msra.mxu0 %v622
    %764 = vmatprep.subr.bf16.mxu0 0
    %765 = vmatpush1.bf16.msra.mxu0 %v623
    %766 = vmatprep.subr.bf16.mxu0 0
    %767 = vmatpush1.bf16.msra.mxu0 %v624
    %768 = vmatprep.subr.bf16.mxu0 0
    %769 = vmatpush1.bf16.msra.mxu0 %v625
    %770 = vmatprep.subr.bf16.mxu0 0
    %771 = vmatpush1.bf16.msra.mxu0 %v626
    %772 = vmatprep.subr.bf16.mxu0 0
    %773 = vmatpush1.bf16.msra.mxu0 %v627
    %774 = vmatprep.subr.bf16.mxu0 0
    %775 = vmatpush1.bf16.msra.mxu0 %v628
    %776 = vmatprep.subr.bf16.mxu0 0
    %777 = vmatpush1.bf16.msra.mxu0 %v629
    %778 = vmatprep.subr.bf16.mxu0 0
    %779 = vmatpush1.bf16.msra.mxu0 %v630
    %780 = vmatprep.mubr.bf16.mxu0 %v232
    %781 = vmatmul.mubr.bf16.gmra.mrb[0].mxu0 %v231
    %v782 = vpop.f32.mrb[0].mxu0
    %v783 = vadd.f32 0.0, %v782
    %v784 = vpop.f32.mrb[0].mxu0
    %v785 = vpop.f32.mrb[0].mxu0
    %v786 = vpop.f32.mrb[0].mxu0
    %787 = vdwg.mxu0
    %788 = vmatprep.subr.bf16.mxu0 0
    %789 = vmatpush1.bf16.msra.mxu0 %v631
    %790 = vmatprep.subr.bf16.mxu0 0
    %791 = vmatpush1.bf16.msra.mxu0 %v632
    %792 = vmatprep.subr.bf16.mxu0 0
    %793 = vmatpush1.bf16.msra.mxu0 %v633
    %794 = vmatprep.subr.bf16.mxu0 0
    %795 = vmatpush1.bf16.msra.mxu0 %v634
    %796 = vmatprep.subr.bf16.mxu0 0
    %797 = vmatpush1.bf16.msra.mxu0 %v635
    %798 = vmatprep.subr.bf16.mxu0 0
    %799 = vmatpush1.bf16.msra.mxu0 %v636
    %800 = vmatprep.subr.bf16.mxu0 0
    %801 = vmatpush1.bf16.msra.mxu0 %v637
    %802 = vmatprep.subr.bf16.mxu0 0
    %803 = vmatpush1.bf16.msra.mxu0 %v638
    %804 = vmatprep.subr.bf16.mxu0 0
    %805 = vmatpush1.bf16.msra.mxu0 %v639
    %806 = vmatprep.subr.bf16.mxu0 0
    %807 = vmatpush1.bf16.msra.mxu0 %v640
    %808 = vmatprep.subr.bf16.mxu0 0
    %809 = vmatpush1.bf16.msra.mxu0 %v641
    %810 = vmatprep.subr.bf16.mxu0 0
    %811 = vmatpush1.bf16.msra.mxu0 %v642
    %812 = vmatprep.subr.bf16.mxu0 0
    %813 = vmatpush1.bf16.msra.mxu0 %v643
    %814 = vmatprep.subr.bf16.mxu0 0
    %815 = vmatpush1.bf16.msra.mxu0 %v644
    %816 = vmatprep.subr.bf16.mxu0 0
    %817 = vmatpush1.bf16.msra.mxu0 %v645
    %818 = vmatprep.subr.bf16.mxu0 0
    %819 = vmatpush1.bf16.msra.mxu0 %v646
    %820 = vmatprep.mubr.bf16.mxu0 %v234
    %821 = vmatmul.mubr.bf16.gmra.mrb[0].mxu0 %v233
    %v822 = vpop.f32.mrb[0].mxu0
    %v823 = vadd.f32 %v783, %v822
    %v824 = vpop.f32.mrb[0].mxu0
    %v825 = vpop.f32.mrb[0].mxu0
    %v826 = vpop.f32.mrb[0].mxu0
    %827 = vdwg.mxu0
    %828 = vmatprep.subr.bf16.mxu0 0
    %829 = vmatpush1.bf16.msra.mxu0 %v647
    %830 = vmatprep.subr.bf16.mxu0 0
    %831 = vmatpush1.bf16.msra.mxu0 %v648
    %832 = vmatprep.subr.bf16.mxu0 0
    %833 = vmatpush1.bf16.msra.mxu0 %v649
    %834 = vmatprep.subr.bf16.mxu0 0
    %835 = vmatpush1.bf16.msra.mxu0 %v650
    %836 = vmatprep.subr.bf16.mxu0 0
    %837 = vmatpush1.bf16.msra.mxu0 %v651
    %838 = vmatprep.subr.bf16.mxu0 0
    %839 = vmatpush1.bf16.msra.mxu0 %v652
    %840 = vmatprep.subr.bf16.mxu0 0
    %841 = vmatpush1.bf16.msra.mxu0 %v653
    %842 = vmatprep.subr.bf16.mxu0 0
    %843 = vmatpush1.bf16.msra.mxu0 %v654
    %844 = vmatprep.subr.bf16.mxu0 0
    %845 = vmatpush1.bf16.msra.mxu0 %v655
    %846 = vmatprep.subr.bf16.mxu0 0
    %847 = vmatpush1.bf16.msra.mxu0 %v656
    %848 = vmatprep.subr.bf16.mxu0 0
    %849 = vmatpush1.bf16.msra.mxu0 %v657
    %850 = vmatprep.subr.bf16.mxu0 0
    %851 = vmatpush1.bf16.msra.mxu0 %v658
    %852 = vmatprep.subr.bf16.mxu0 0
    %853 = vmatpush1.bf16.msra.mxu0 %v659
    %854 = vmatprep.subr.bf16.mxu0 0
    %855 = vmatpush1.bf16.msra.mxu0 %v660
    %856 = vmatprep.subr.bf16.mxu0 0
    %857 = vmatpush1.bf16.msra.mxu0 %v661
    %858 = vmatprep.subr.bf16.mxu0 0
    %859 = vmatpush1.bf16.msra.mxu0 %v662
    %860 = vmatprep.mubr.bf16.mxu0 %v236
    %861 = vmatmul.mubr.bf16.gmra.mrb[0].mxu0 %v235
    %v862 = vpop.f32.mrb[0].mxu0
    %v863 = vadd.f32 %v823, %v862
    %v864 = vpop.f32.mrb[0].mxu0
    %v865 = vpop.f32.mrb[0].mxu0
    %v866 = vpop.f32.mrb[0].mxu0
    %867 = vdwg.mxu0
    %868 = vmatprep.subr.bf16.mxu0 0
    %869 = vmatpush1.bf16.msra.mxu0 %v663
    %870 = vmatprep.subr.bf16.mxu0 0
    %871 = vmatpush1.bf16.msra.mxu0 %v664
    %872 = vmatprep.subr.bf16.mxu0 0
    %873 = vmatpush1.bf16.msra.mxu0 %v665
    %874 = vmatprep.subr.bf16.mxu0 0
    %875 = vmatpush1.bf16.msra.mxu0 %v666
    %876 = vmatprep.subr.bf16.mxu0 0
    %877 = vmatpush1.bf16.msra.mxu0 %v667
    %878 = vmatprep.subr.bf16.mxu0 0
    %879 = vmatpush1.bf16.msra.mxu0 %v668
    %880 = vmatprep.subr.bf16.mxu0 0
    %881 = vmatpush1.bf16.msra.mxu0 %v669
    %882 = vmatprep.subr.bf16.mxu0 0
    %883 = vmatpush1.bf16.msra.mxu0 %v670
    %884 = vmatprep.subr.bf16.mxu0 0
    %885 = vmatpush1.bf16.msra.mxu0 %v671
    %886 = vmatprep.subr.bf16.mxu0 0
    %887 = vmatpush1.bf16.msra.mxu0 %v672
    %888 = vmatprep.subr.bf16.mxu0 0
    %889 = vmatpush1.bf16.msra.mxu0 %v673
    %890 = vmatprep.subr.bf16.mxu0 0
    %891 = vmatpush1.bf16.msra.mxu0 %v674
    %892 = vmatprep.subr.bf16.mxu0 0
    %893 = vmatpush1.bf16.msra.mxu0 %v675
    %894 = vmatprep.subr.bf16.mxu0 0
    %895 = vmatpush1.bf16.msra.mxu0 %v676
    %896 = vmatprep.subr.bf16.mxu0 0
    %897 = vmatpush1.bf16.msra.mxu0 %v746
    %898 = vmatprep.subr.bf16.mxu0 0
    %899 = vmatpush1.bf16.msra.mxu0 0
    %900 = vmatprep.mubr.bf16.mxu0 %v742
    %901 = vmatmul.mubr.bf16.gmra.mrb[0].mxu0 %v237
    %v902 = vpop.f32.mrb[0].mxu0
    %v903 = vadd.f32 %v863, %v902
    %v904 = vpop.f32.mrb[0].mxu0
    %v905 = vpop.f32.mrb[0].mxu0
    %v906 = vpop.f32.mrb[0].mxu0
    %907 = vdwg.mxu0
    %v1033 = vunpack.c.l.b16 %v98
    %v1034 = vunpack.c.l.b16 %v99
    %v1035 = vunpack.c.l.b16 %v100
    %v1036 = vunpack.c.l.b16 %v101
    %v1037 = vunpack.c.l.b16 %v102
    %v1038 = vunpack.c.l.b16 %v103
    %v1039 = vunpack.c.l.b16 %v104
    %v1040 = vunpack.c.l.b16 %v105
    %v1041 = vunpack.c.l.b16 %v106
    %v1042 = vunpack.c.l.b16 %v107
    %v1043 = vunpack.c.l.b16 %v108
    %v1044 = vunpack.c.l.b16 %v109
    %v1045 = vunpack.c.l.b16 %v110
    %v1046 = vunpack.c.l.b16 %v111
    %v1047 = vunpack.c.l.b16 %v112
    %v1048 = vunpack.c.l.b16 %v113
    %v1049 = vunpack.c.l.b16 %v114
    %v1050 = vunpack.c.l.b16 %v115
    %v1051 = vunpack.c.l.b16 %v116
    %v1052 = vunpack.c.l.b16 %v117
    %v1053 = vunpack.c.l.b16 %v118
    %v1054 = vunpack.c.l.b16 %v119
    %v1055 = vunpack.c.l.b16 %v120
    %v1056 = vunpack.c.l.b16 %v121
    %v1057 = vunpack.c.l.b16 %v122
    %v1058 = vunpack.c.l.b16 %v123
    %v1059 = vunpack.c.l.b16 %v124
    %v1060 = vunpack.c.l.b16 %v125
    %v1061 = vunpack.c.l.b16 %v126
    %v1062 = vunpack.c.l.b16 %v127
    %v1063 = vunpack.c.l.b16 %v128
    %v1064 = vunpack.c.l.b16 %v129
    %v1065 = vunpack.c.l.b16 %v130
    %v1066 = vunpack.c.l.b16 %v131
    %v1067 = vunpack.c.l.b16 %v132
    %v1068 = vunpack.c.l.b16 %v133
    %v1069 = vunpack.c.l.b16 %v134
    %v1070 = vunpack.c.l.b16 %v135
    %v1071 = vunpack.c.l.b16 %v136
    %v1072 = vunpack.c.l.b16 %v137
    %v1073 = vunpack.c.l.b16 %v138
    %v1074 = vunpack.c.l.b16 %v139
    %v1075 = vunpack.c.l.b16 %v140
    %v1076 = vunpack.c.l.b16 %v141
    %v1077 = vunpack.c.l.b16 %v142
    %v1078 = vunpack.c.l.b16 %v143
    %v1079 = vunpack.c.l.b16 %v144
    %v1080 = vunpack.c.l.b16 %v145
    %v1081 = vunpack.c.l.b16 %v146
    %v1082 = vunpack.c.l.b16 %v147
    %v1083 = vunpack.c.l.b16 %v148
    %v1084 = vunpack.c.l.b16 %v149
    %v1085 = vunpack.c.l.b16 %v150
    %v1086 = vunpack.c.l.b16 %v151
    %v1087 = vunpack.c.l.b16 %v152
    %v1088 = vunpack.c.l.b16 %v153
    %v1089 = vunpack.c.l.b16 %v154
    %v1090 = vunpack.c.l.b16 %v155
    %v1091 = vunpack.c.l.b16 %v156
    %v1092 = vunpack.c.l.b16 %v157
    %v1093 = vunpack.c.l.b16 %v158
    %v1094 = vunpack.c.l.b16 %v159
    %v1095 = vunpack.c.l.b16 %v160
    %v1096 = vunpack.c.l.b16 %v161
    %v1097 = vunpack.c.l.b16 %v162
    %v1098 = vunpack.c.l.b16 %v163
    %v1099 = vunpack.c.l.b16 %v164
    %v1100 = vunpack.c.l.b16 %v165
    %v1101 = vunpack.c.l.b16 %v166
    %v1102 = vunpack.c.l.b16 %v167
    %v1103 = vunpack.c.l.b16 %v168
    %v1104 = vunpack.c.l.b16 %v169
    %v1105 = vunpack.c.l.b16 %v170
    %v1106 = vunpack.c.l.b16 %v171
    %v1107 = vunpack.c.l.b16 %v172
    %v1108 = vunpack.c.l.b16 %v173
    %v1109 = vunpack.c.l.b16 %v174
    %v1110 = vunpack.c.l.b16 %v175
    %v1111 = vunpack.c.l.b16 %v176
    %v1112 = vunpack.c.l.b16 %v177
    %v1113 = vunpack.c.l.b16 %v178
    %v1114 = vunpack.c.l.b16 %v179
    %v1115 = vunpack.c.l.b16 %v180
    %v1116 = vunpack.c.l.b16 %v181
    %v1117 = vunpack.c.l.b16 %v182
    %v1118 = vunpack.c.l.b16 %v183
    %v1119 = vunpack.c.l.b16 %v184
    %v1120 = vunpack.c.l.b16 %v185
    %v1121 = vunpack.c.l.b16 %v186
    %v1122 = vunpack.c.l.b16 %v187
    %v1123 = vunpack.c.l.b16 %v188
    %v1124 = vunpack.c.l.b16 %v189
    %v1125 = vunpack.c.l.b16 %v190
    %v1126 = vunpack.c.l.b16 %v191
    %v1127 = vunpack.c.l.b16 %v192
    %v1128 = vunpack.c.l.b16 %v193
    %v1129 = vunpack.c.l.b16 %v194
    %v1130 = vunpack.c.l.b16 %v195
    %v1131 = vunpack.c.l.b16 %v196
    %v1132 = vunpack.c.l.b16 %v197
    %v1133 = vunpack.c.l.b16 %v198
    %v1134 = vunpack.c.l.b16 %v199
    %v1135 = vunpack.c.l.b16 %v200
    %v1136 = vunpack.c.l.b16 %v201
    %v1137 = vunpack.c.l.b16 %v202
    %v1138 = vunpack.c.l.b16 %v203
    %v1139 = vunpack.c.l.b16 %v204
    %v1140 = vunpack.c.l.b16 %v205
    %v1141 = vunpack.c.l.b16 %v206
    %v1142 = vunpack.c.l.b16 %v207
    %v1143 = vunpack.c.l.b16 %v208
    %v1144 = vunpack.c.l.b16 %v209
    %v1145 = vunpack.c.l.b16 %v210
    %v1146 = vunpack.c.l.b16 %v211
    %v1147 = vunpack.c.l.b16 %v212
    %v1148 = vunpack.c.l.b16 %v213
    %v1149 = vunpack.c.l.b16 %v214
    %v1150 = vunpack.c.l.b16 %v215
    %v1151 = vunpack.c.l.b16 %v216
    %v1152 = vunpack.c.l.b16 %v217
    %v1153 = vunpack.c.l.b16 %v218
    %v1154 = vunpack.c.l.b16 %v219
    %v1155 = vunpack.c.l.b16 %v220
    %v1156 = vunpack.c.l.b16 %v221
    %v1157 = vunpack.c.l.b16 %v222
    %v1158 = vpack.c.b16 %v1034, %v1033
    %v1159 = vpack.c.b16 %v1036, %v1035
    %v1160 = vpack.c.b16 %v1038, %v1037
    %v1161 = vpack.c.b16 %v1040, %v1039
    %v1162 = vpack.c.b16 %v1042, %v1041
    %v1163 = vpack.c.b16 %v1044, %v1043
    %v1164 = vpack.c.b16 %v1046, %v1045
    %v1165 = vpack.c.b16 %v1048, %v1047
    %v1166 = vpack.c.b16 %v1050, %v1049
    %v1167 = vpack.c.b16 %v1052, %v1051
    %v1168 = vpack.c.b16 %v1054, %v1053
    %v1169 = vpack.c.b16 %v1056, %v1055
    %v1170 = vpack.c.b16 %v1058, %v1057
    %v1171 = vpack.c.b16 %v1060, %v1059
    %v1172 = vpack.c.b16 %v1062, %v1061
    %v1173 = vpack.c.b16 %v1064, %v1063
    %v1174 = vpack.c.b16 %v1066, %v1065
    %v1175 = vpack.c.b16 %v1068, %v1067
    %v1176 = vpack.c.b16 %v1070, %v1069
    %v1177 = vpack.c.b16 %v1072, %v1071
    %v1178 = vpack.c.b16 %v1074, %v1073
    %v1179 = vpack.c.b16 %v1076, %v1075
    %v1180 = vpack.c.b16 %v1078, %v1077
    %v1181 = vpack.c.b16 %v1080, %v1079
    %v1182 = vpack.c.b16 %v1082, %v1081
    %v1183 = vpack.c.b16 %v1084, %v1083
    %v1184 = vpack.c.b16 %v1086, %v1085
    %v1185 = vpack.c.b16 %v1088, %v1087
    %v1186 = vpack.c.b16 %v1090, %v1089
    %v1187 = vpack.c.b16 %v1092, %v1091
    %v1188 = vpack.c.b16 %v1094, %v1093
    %v1189 = vpack.c.b16 %v1096, %v1095
    %v1190 = vpack.c.b16 %v1098, %v1097
    %v1191 = vpack.c.b16 %v1100, %v1099
    %v1192 = vpack.c.b16 %v1102, %v1101
    %v1193 = vpack.c.b16 %v1104, %v1103
    %v1194 = vpack.c.b16 %v1106, %v1105
    %v1195 = vpack.c.b16 %v1108, %v1107
    %v1196 = vpack.c.b16 %v1110, %v1109
    %v1197 = vpack.c.b16 %v1112, %v1111
    %v1198 = vpack.c.b16 %v1114, %v1113
    %v1199 = vpack.c.b16 %v1116, %v1115
    %v1200 = vpack.c.b16 %v1118, %v1117
    %v1201 = vpack.c.b16 %v1120, %v1119
    %v1202 = vpack.c.b16 %v1122, %v1121
    %v1203 = vpack.c.b16 %v1124, %v1123
    %v1204 = vpack.c.b16 %v1126, %v1125
    %v1205 = vpack.c.b16 %v1128, %v1127
    %v1206 = vpack.c.b16 %v1130, %v1129
    %v1207 = vpack.c.b16 %v1132, %v1131
    %v1208 = vpack.c.b16 %v1134, %v1133
    %v1209 = vpack.c.b16 %v1136, %v1135
    %v1210 = vpack.c.b16 %v1138, %v1137
    %v1211 = vpack.c.b16 %v1140, %v1139
    %v1212 = vpack.c.b16 %v1142, %v1141
    %v1213 = vpack.c.b16 %v1144, %v1143
    %v1214 = vpack.c.b16 %v1146, %v1145
    %v1215 = vpack.c.b16 %v1148, %v1147
    %v1216 = vpack.c.b16 %v1150, %v1149
    %v1217 = vpack.c.b16 %v1152, %v1151
    %v1218 = vpack.c.b16 %v1154, %v1153
    %v1219 = vpack.c.b16 %v1156, %v1155
    %v1220 = vpack.c.b16 %v1157, %v1157
    %v1284 = vsel %vm740, %v97, 0
    %v1287 = vsel %vm744, %v1220, 0
    %1289 = vmatprep.subr.bf16.mxu0 0
    %1290 = vmatpush1.bf16.msra.mxu0 %v1158
    %1291 = vmatprep.subr.bf16.mxu0 0
    %1292 = vmatpush1.bf16.msra.mxu0 %v1159
    %1293 = vmatprep.subr.bf16.mxu0 0
    %1294 = vmatpush1.bf16.msra.mxu0 %v1160
    %1295 = vmatprep.subr.bf16.mxu0 0
    %1296 = vmatpush1.bf16.msra.mxu0 %v1161
    %1297 = vmatprep.subr.bf16.mxu0 0
    %1298 = vmatpush1.bf16.msra.mxu0 %v1162
    %1299 = vmatprep.subr.bf16.mxu0 0
    %1300 = vmatpush1.bf16.msra.mxu0 %v1163
    %1301 = vmatprep.subr.bf16.mxu0 0
    %1302 = vmatpush1.bf16.msra.mxu0 %v1164
    %1303 = vmatprep.subr.bf16.mxu0 0
    %1304 = vmatpush1.bf16.msra.mxu0 %v1165
    %1305 = vmatprep.subr.bf16.mxu0 0
    %1306 = vmatpush1.bf16.msra.mxu0 %v1166
    %1307 = vmatprep.subr.bf16.mxu0 0
    %1308 = vmatpush1.bf16.msra.mxu0 %v1167
    %1309 = vmatprep.subr.bf16.mxu0 0
    %1310 = vmatpush1.bf16.msra.mxu0 %v1168
    %1311 = vmatprep.subr.bf16.mxu0 0
    %1312 = vmatpush1.bf16.msra.mxu0 %v1169
    %1313 = vmatprep.subr.bf16.mxu0 0
    %1314 = vmatpush1.bf16.msra.mxu0 %v1170
    %1315 = vmatprep.subr.bf16.mxu0 0
    %1316 = vmatpush1.bf16.msra.mxu0 %v1171
    %1317 = vmatprep.subr.bf16.mxu0 0
    %1318 = vmatpush1.bf16.msra.mxu0 %v1172
    %1319 = vmatprep.subr.bf16.mxu0 0
    %1320 = vmatpush1.bf16.msra.mxu0 %v1173
    %1321 = vmatprep.mubr.bf16.mxu0 %v91
    %1322 = vmatmul.mubr.bf16.gmra.mrb[0].mxu0 %v90
    %v1323 = vpop.f32.mrb[0].mxu0
    %v1324 = vadd.f32 %v903, %v1323
    %v1325 = vpop.f32.mrb[0].mxu0
    %v1326 = vpop.f32.mrb[0].mxu0
    %v1327 = vpop.f32.mrb[0].mxu0
    %1328 = vdwg.mxu0
    %1329 = vmatprep.subr.bf16.mxu0 0
    %1330 = vmatpush1.bf16.msra.mxu0 %v1174
    %1331 = vmatprep.subr.bf16.mxu0 0
    %1332 = vmatpush1.bf16.msra.mxu0 %v1175
    %1333 = vmatprep.subr.bf16.mxu0 0
    %1334 = vmatpush1.bf16.msra.mxu0 %v1176
    %1335 = vmatprep.subr.bf16.mxu0 0
    %1336 = vmatpush1.bf16.msra.mxu0 %v1177
    %1337 = vmatprep.subr.bf16.mxu0 0
    %1338 = vmatpush1.bf16.msra.mxu0 %v1178
    %1339 = vmatprep.subr.bf16.mxu0 0
    %1340 = vmatpush1.bf16.msra.mxu0 %v1179
    %1341 = vmatprep.subr.bf16.mxu0 0
    %1342 = vmatpush1.bf16.msra.mxu0 %v1180
    %1343 = vmatprep.subr.bf16.mxu0 0
    %1344 = vmatpush1.bf16.msra.mxu0 %v1181
    %1345 = vmatprep.subr.bf16.mxu0 0
    %1346 = vmatpush1.bf16.msra.mxu0 %v1182
    %1347 = vmatprep.subr.bf16.mxu0 0
    %1348 = vmatpush1.bf16.msra.mxu0 %v1183
    %1349 = vmatprep.subr.bf16.mxu0 0
    %1350 = vmatpush1.bf16.msra.mxu0 %v1184
    %1351 = vmatprep.subr.bf16.mxu0 0
    %1352 = vmatpush1.bf16.msra.mxu0 %v1185
    %1353 = vmatprep.subr.bf16.mxu0 0
    %1354 = vmatpush1.bf16.msra.mxu0 %v1186
    %1355 = vmatprep.subr.bf16.mxu0 0
    %1356 = vmatpush1.bf16.msra.mxu0 %v1187
    %1357 = vmatprep.subr.bf16.mxu0 0
    %1358 = vmatpush1.bf16.msra.mxu0 %v1188
    %1359 = vmatprep.subr.bf16.mxu0 0
    %1360 = vmatpush1.bf16.msra.mxu0 %v1189
    %1361 = vmatprep.mubr.bf16.mxu0 %v93
    %1362 = vmatmul.mubr.bf16.gmra.mrb[0].mxu0 %v92
    %v1363 = vpop.f32.mrb[0].mxu0
    %v1364 = vadd.f32 %v1324, %v1363
    %v1365 = vpop.f32.mrb[0].mxu0
    %v1366 = vpop.f32.mrb[0].mxu0
    %v1367 = vpop.f32.mrb[0].mxu0
    %1368 = vdwg.mxu0
    %1369 = vmatprep.subr.bf16.mxu0 0
    %1370 = vmatpush1.bf16.msra.mxu0 %v1190
    %1371 = vmatprep.subr.bf16.mxu0 0
    %1372 = vmatpush1.bf16.msra.mxu0 %v1191
    %1373 = vmatprep.subr.bf16.mxu0 0
    %1374 = vmatpush1.bf16.msra.mxu0 %v1192
    %1375 = vmatprep.subr.bf16.mxu0 0
    %1376 = vmatpush1.bf16.msra.mxu0 %v1193
    %1377 = vmatprep.subr.bf16.mxu0 0
    %1378 = vmatpush1.bf16.msra.mxu0 %v1194
    %1379 = vmatprep.subr.bf16.mxu0 0
    %1380 = vmatpush1.bf16.msra.mxu0 %v1195
    %1381 = vmatprep.subr.bf16.mxu0 0
    %1382 = vmatpush1.bf16.msra.mxu0 %v1196
    %1383 = vmatprep.subr.bf16.mxu0 0
    %1384 = vmatpush1.bf16.msra.mxu0 %v1197
    %1385 = vmatprep.subr.bf16.mxu0 0
    %1386 = vmatpush1.bf16.msra.mxu0 %v1198
    %1387 = vmatprep.subr.bf16.mxu0 0
    %1388 = vmatpush1.bf16.msra.mxu0 %v1199
    %1389 = vmatprep.subr.bf16.mxu0 0
    %1390 = vmatpush1.bf16.msra.mxu0 %v1200
    %1391 = vmatprep.subr.bf16.mxu0 0
    %1392 = vmatpush1.bf16.msra.mxu0 %v1201
    %1393 = vmatprep.subr.bf16.mxu0 0
    %1394 = vmatpush1.bf16.msra.mxu0 %v1202
    %1395 = vmatprep.subr.bf16.mxu0 0
    %1396 = vmatpush1.bf16.msra.mxu0 %v1203
    %1397 = vmatprep.subr.bf16.mxu0 0
    %1398 = vmatpush1.bf16.msra.mxu0 %v1204
    %1399 = vmatprep.subr.bf16.mxu0 0
    %1400 = vmatpush1.bf16.msra.mxu0 %v1205
    %1401 = vmatprep.mubr.bf16.mxu0 %v95
    %1402 = vmatmul.mubr.bf16.gmra.mrb[0].mxu0 %v94
    %v1403 = vpop.f32.mrb[0].mxu0
    %v1404 = vadd.f32 %v1364, %v1403
    %v1405 = vpop.f32.mrb[0].mxu0
    %v1406 = vpop.f32.mrb[0].mxu0
    %v1407 = vpop.f32.mrb[0].mxu0
    %1408 = vdwg.mxu0
    %1409 = vmatprep.subr.bf16.mxu0 0
    %1410 = vmatpush1.bf16.msra.mxu0 %v1206
    %1411 = vmatprep.subr.bf16.mxu0 0
    %1412 = vmatpush1.bf16.msra.mxu0 %v1207
    %1413 = vmatprep.subr.bf16.mxu0 0
    %1414 = vmatpush1.bf16.msra.mxu0 %v1208
    %1415 = vmatprep.subr.bf16.mxu0 0
    %1416 = vmatpush1.bf16.msra.mxu0 %v1209
    %1417 = vmatprep.subr.bf16.mxu0 0
    %1418 = vmatpush1.bf16.msra.mxu0 %v1210
    %1419 = vmatprep.subr.bf16.mxu0 0
    %1420 = vmatpush1.bf16.msra.mxu0 %v1211
    %1421 = vmatprep.subr.bf16.mxu0 0
    %1422 = vmatpush1.bf16.msra.mxu0 %v1212
    %1423 = vmatprep.subr.bf16.mxu0 0
    %1424 = vmatpush1.bf16.msra.mxu0 %v1213
    %1425 = vmatprep.subr.bf16.mxu0 0
    %1426 = vmatpush1.bf16.msra.mxu0 %v1214
    %1427 = vmatprep.subr.bf16.mxu0 0
    %1428 = vmatpush1.bf16.msra.mxu0 %v1215
    %1429 = vmatprep.subr.bf16.mxu0 0
    %1430 = vmatpush1.bf16.msra.mxu0 %v1216
    %1431 = vmatprep.subr.bf16.mxu0 0
    %1432 = vmatpush1.bf16.msra.mxu0 %v1217
    %1433 = vmatprep.subr.bf16.mxu0 0
    %1434 = vmatpush1.bf16.msra.mxu0 %v1218
    %1435 = vmatprep.subr.bf16.mxu0 0
    %1436 = vmatpush1.bf16.msra.mxu0 %v1219
    %1437 = vmatprep.subr.bf16.mxu0 0
    %1438 = vmatpush1.bf16.msra.mxu0 %v1287
    %1439 = vmatprep.subr.bf16.mxu0 0
    %1440 = vmatpush1.bf16.msra.mxu0 0
    %1441 = vmatprep.mubr.bf16.mxu0 %v1284
    %1442 = vmatmul.mubr.bf16.gmra.mrb[0].mxu0 %v96
    %v1443 = vpop.f32.mrb[0].mxu0
    %v1444 = vadd.f32 %v1404, %v1443
    %v1445 = vpop.f32.mrb[0].mxu0
    %v1446 = vpop.f32.mrb[0].mxu0
    %v1447 = vpop.f32.mrb[0].mxu0
    %1448 = vdwg.mxu0
    %v1449 = vld [vmem:[#allocation7] sm:$0xff]
    %v1450 = vld [vmem:[#allocation7 + $0x8] sm:$0xff]
    %v1451 = vld [vmem:[#allocation7 + $0x10] sm:$0xff]
    %v1452 = vld [vmem:[#allocation7 + $0x18] sm:$0xff]
    %v1453 = vld [vmem:[#allocation7 + $0x20] sm:$0xff]
    %v1454 = vld [vmem:[#allocation7 + $0x28] sm:$0xff]
    %v1455 = vld [vmem:[#allocation7 + $0x30] sm:$0xff]
    %v1456 = vld [vmem:[#allocation7 + $0x38] sm:$0xff]
    %v1457 = vpack.c.bf16 %v1449, %v1449
    %v1458 = vpack.c.bf16 %v1450, %v1450
    %v1459 = vpack.c.bf16 %v1451, %v1451
    %v1460 = vpack.c.bf16 %v1452, %v1452
    %v1461 = vpack.c.bf16 %v1453, %v1453
    %v1462 = vpack.c.bf16 %v1454, %v1454
    %v1463 = vpack.c.bf16 %v1455, %v1455
    %v1464 = vpack.c.bf16 %v1456, %v1456
    %s1465 = scalar_lea.vmem [#allocation8], 1000
    %v1466 = vld [vmem:[%s1465] sm:$0xf]
    %v1467 = vld [vmem:[%s1465 + $0x4] sm:$0xf]
    %v1468 = vld [vmem:[%s1465 + $0x8] sm:$0xf]
    %v1469 = vld [vmem:[%s1465 + $0xc] sm:$0xf]
    %v1470 = vld [vmem:[%s1465 + $0x10] sm:$0xf]
    %v1471 = vld [vmem:[%s1465 + $0x14] sm:$0xf]
    %v1472 = vld [vmem:[%s1465 + $0x18] sm:$0xf]
    %v1473 = vld [vmem:[%s1465 + $0x1c] sm:$0xf]
    %v1474 = vld [vmem:[%s1465 + $0x20] sm:$0xf]
    %v1475 = vld [vmem:[%s1465 + $0x24] sm:$0xf]
    %v1476 = vld [vmem:[%s1465 + $0x28] sm:$0xf]
    %v1477 = vld [vmem:[%s1465 + $0x2c] sm:$0xf]
    %v1478 = vld [vmem:[%s1465 + $0x30] sm:$0xf]
    %v1479 = vld [vmem:[%s1465 + $0x34] sm:$0xf]
    %v1480 = vld [vmem:[%s1465 + $0x38] sm:$0xf]
    %v1481 = vld [vmem:[%s1465 + $0x3c] sm:$0xf]
    %v1482 = vld [vmem:[%s1465 + $0x40] sm:$0xf]
    %v1483 = vld [vmem:[%s1465 + $0x44] sm:$0xf]
    %v1484 = vld [vmem:[%s1465 + $0x48] sm:$0xf]
    %v1485 = vld [vmem:[%s1465 + $0x4c] sm:$0xf]
    %v1486 = vld [vmem:[%s1465 + $0x50] sm:$0xf]
    %v1487 = vld [vmem:[%s1465 + $0x54] sm:$0xf]
    %v1488 = vld [vmem:[%s1465 + $0x58] sm:$0xf]
    %v1489 = vld [vmem:[%s1465 + $0x5c] sm:$0xf]
    %v1490 = vld [vmem:[%s1465 + $0x60] sm:$0xf]
    %v1491 = vld [vmem:[%s1465 + $0x64] sm:$0xf]
    %v1492 = vld [vmem:[%s1465 + $0x68] sm:$0xf]
    %v1493 = vld [vmem:[%s1465 + $0x6c] sm:$0xf]
    %v1494 = vld [vmem:[%s1465 + $0x70] sm:$0xf]
    %v1495 = vld [vmem:[%s1465 + $0x74] sm:$0xf]
    %v1496 = vld [vmem:[%s1465 + $0x78] sm:$0xf]
    %v1497 = vld [vmem:[%s1465 + $0x7c] sm:$0xf]
    %v1498 = vld [vmem:[%s1465 + $0x80] sm:$0xf]
    %v1499 = vld [vmem:[%s1465 + $0x84] sm:$0xf]
    %v1500 = vld [vmem:[%s1465 + $0x88] sm:$0xf]
    %v1501 = vld [vmem:[%s1465 + $0x8c] sm:$0xf]
    %v1502 = vld [vmem:[%s1465 + $0x90] sm:$0xf]
    %v1503 = vld [vmem:[%s1465 + $0x94] sm:$0xf]
    %v1504 = vld [vmem:[%s1465 + $0x98] sm:$0xf]
    %v1505 = vld [vmem:[%s1465 + $0x9c] sm:$0xf]
    %v1506 = vld [vmem:[%s1465 + $0xa0] sm:$0xf]
    %v1507 = vld [vmem:[%s1465 + $0xa4] sm:$0xf]
    %v1508 = vld [vmem:[%s1465 + $0xa8] sm:$0xf]
    %v1509 = vld [vmem:[%s1465 + $0xac] sm:$0xf]
    %v1510 = vld [vmem:[%s1465 + $0xb0] sm:$0xf]
    %v1511 = vld [vmem:[%s1465 + $0xb4] sm:$0xf]
    %v1512 = vld [vmem:[%s1465 + $0xb8] sm:$0xf]
    %v1513 = vld [vmem:[%s1465 + $0xbc] sm:$0xf]
    %v1514 = vld [vmem:[%s1465 + $0xc0] sm:$0xf]
    %v1515 = vld [vmem:[%s1465 + $0xc4] sm:$0xf]
    %v1516 = vld [vmem:[%s1465 + $0xc8] sm:$0xf]
    %v1517 = vld [vmem:[%s1465 + $0xcc] sm:$0xf]
    %v1518 = vld [vmem:[%s1465 + $0xd0] sm:$0xf]
    %v1519 = vld [vmem:[%s1465 + $0xd4] sm:$0xf]
    %v1520 = vld [vmem:[%s1465 + $0xd8] sm:$0xf]
    %v1521 = vld [vmem:[%s1465 + $0xdc] sm:$0xf]
    %v1522 = vld [vmem:[%s1465 + $0xe0] sm:$0xf]
    %v1523 = vld [vmem:[%s1465 + $0xe4] sm:$0xf]
    %v1524 = vld [vmem:[%s1465 + $0xe8] sm:$0xf]
    %v1525 = vld [vmem:[%s1465 + $0xec] sm:$0xf]
    %v1526 = vld [vmem:[%s1465 + $0xf0] sm:$0xf]
    %v1527 = vld [vmem:[%s1465 + $0xf4] sm:$0xf]
    %v1528 = vld [vmem:[%s1465 + $0xf8] sm:$0xf]
    %v1529 = vld [vmem:[%s1465 + $0xfc] sm:$0xf]
    %v1530 = vld [vmem:[%s1465 + $0x100] sm:$0xf]
    %v1531 = vld [vmem:[%s1465 + $0x104] sm:$0xf]
    %v1532 = vld [vmem:[%s1465 + $0x108] sm:$0xf]
    %v1533 = vld [vmem:[%s1465 + $0x10c] sm:$0xf]
    %v1534 = vld [vmem:[%s1465 + $0x110] sm:$0xf]
    %v1535 = vld [vmem:[%s1465 + $0x114] sm:$0xf]
    %v1536 = vld [vmem:[%s1465 + $0x118] sm:$0xf]
    %v1537 = vld [vmem:[%s1465 + $0x11c] sm:$0xf]
    %v1538 = vld [vmem:[%s1465 + $0x120] sm:$0xf]
    %v1539 = vld [vmem:[%s1465 + $0x124] sm:$0xf]
    %v1540 = vld [vmem:[%s1465 + $0x128] sm:$0xf]
    %v1541 = vld [vmem:[%s1465 + $0x12c] sm:$0xf]
    %v1542 = vld [vmem:[%s1465 + $0x130] sm:$0xf]
    %v1543 = vld [vmem:[%s1465 + $0x134] sm:$0xf]
    %v1544 = vld [vmem:[%s1465 + $0x138] sm:$0xf]
    %v1545 = vld [vmem:[%s1465 + $0x13c] sm:$0xf]
    %v1546 = vld [vmem:[%s1465 + $0x140] sm:$0xf]
    %v1547 = vld [vmem:[%s1465 + $0x144] sm:$0xf]
    %v1548 = vld [vmem:[%s1465 + $0x148] sm:$0xf]
    %v1549 = vld [vmem:[%s1465 + $0x14c] sm:$0xf]
    %v1550 = vld [vmem:[%s1465 + $0x150] sm:$0xf]
    %v1551 = vld [vmem:[%s1465 + $0x154] sm:$0xf]
    %v1552 = vld [vmem:[%s1465 + $0x158] sm:$0xf]
    %v1553 = vld [vmem:[%s1465 + $0x15c] sm:$0xf]
    %v1554 = vld [vmem:[%s1465 + $0x160] sm:$0xf]
    %v1555 = vld [vmem:[%s1465 + $0x164] sm:$0xf]
    %v1556 = vld [vmem:[%s1465 + $0x168] sm:$0xf]
    %v1557 = vld [vmem:[%s1465 + $0x16c] sm:$0xf]
    %v1558 = vld [vmem:[%s1465 + $0x170] sm:$0xf]
    %v1559 = vld [vmem:[%s1465 + $0x174] sm:$0xf]
    %v1560 = vld [vmem:[%s1465 + $0x178] sm:$0xf]
    %v1561 = vld [vmem:[%s1465 + $0x17c] sm:$0xf]
    %v1562 = vld [vmem:[%s1465 + $0x180] sm:$0xf]
    %v1563 = vld [vmem:[%s1465 + $0x184] sm:$0xf]
    %v1564 = vld [vmem:[%s1465 + $0x188] sm:$0xf]
    %v1565 = vld [vmem:[%s1465 + $0x18c] sm:$0xf]
    %v1566 = vld [vmem:[%s1465 + $0x190] sm:$0xf]
    %v1567 = vld [vmem:[%s1465 + $0x194] sm:$0xf]
    %v1568 = vld [vmem:[%s1465 + $0x198] sm:$0xf]
    %v1569 = vld [vmem:[%s1465 + $0x19c] sm:$0xf]
    %v1570 = vld [vmem:[%s1465 + $0x1a0] sm:$0xf]
    %v1571 = vld [vmem:[%s1465 + $0x1a4] sm:$0xf]
    %v1572 = vld [vmem:[%s1465 + $0x1a8] sm:$0xf]
    %v1573 = vld [vmem:[%s1465 + $0x1ac] sm:$0xf]
    %v1574 = vld [vmem:[%s1465 + $0x1b0] sm:$0xf]
    %v1575 = vld [vmem:[%s1465 + $0x1b4] sm:$0xf]
    %v1576 = vld [vmem:[%s1465 + $0x1b8] sm:$0xf]
    %v1577 = vld [vmem:[%s1465 + $0x1bc] sm:$0xf]
    %v1578 = vld [vmem:[%s1465 + $0x1c0] sm:$0xf]
    %v1579 = vld [vmem:[%s1465 + $0x1c4] sm:$0xf]
    %v1580 = vld [vmem:[%s1465 + $0x1c8] sm:$0xf]
    %v1581 = vld [vmem:[%s1465 + $0x1cc] sm:$0xf]
    %v1582 = vld [vmem:[%s1465 + $0x1d0] sm:$0xf]
    %v1583 = vld [vmem:[%s1465 + $0x1d4] sm:$0xf]
    %v1584 = vld [vmem:[%s1465 + $0x1d8] sm:$0xf]
    %v1585 = vld [vmem:[%s1465 + $0x1dc] sm:$0xf]
    %v1586 = vld [vmem:[%s1465 + $0x1e0] sm:$0xf]
    %v1587 = vld [vmem:[%s1465 + $0x1e4] sm:$0xf]
    %v1588 = vld [vmem:[%s1465 + $0x1e8] sm:$0xf]
    %v1589 = vld [vmem:[%s1465 + $0x1ec] sm:$0xf]
    %v1590 = vld [vmem:[%s1465 + $0x1f0] sm:$0xf]
    %v1716 = vunpack.c.l.b16 %v1466
    %v1717 = vunpack.c.l.b16 %v1467
    %v1718 = vunpack.c.l.b16 %v1468
    %v1719 = vunpack.c.l.b16 %v1469
    %v1720 = vunpack.c.l.b16 %v1470
    %v1721 = vunpack.c.l.b16 %v1471
    %v1722 = vunpack.c.l.b16 %v1472
    %v1723 = vunpack.c.l.b16 %v1473
    %v1724 = vunpack.c.l.b16 %v1474
    %v1725 = vunpack.c.l.b16 %v1475
    %v1726 = vunpack.c.l.b16 %v1476
    %v1727 = vunpack.c.l.b16 %v1477
    %v1728 = vunpack.c.l.b16 %v1478
    %v1729 = vunpack.c.l.b16 %v1479
    %v1730 = vunpack.c.l.b16 %v1480
    %v1731 = vunpack.c.l.b16 %v1481
    %v1732 = vunpack.c.l.b16 %v1482
    %v1733 = vunpack.c.l.b16 %v1483
    %v1734 = vunpack.c.l.b16 %v1484
    %v1735 = vunpack.c.l.b16 %v1485
    %v1736 = vunpack.c.l.b16 %v1486
    %v1737 = vunpack.c.l.b16 %v1487
    %v1738 = vunpack.c.l.b16 %v1488
    %v1739 = vunpack.c.l.b16 %v1489
    %v1740 = vunpack.c.l.b16 %v1490
    %v1741 = vunpack.c.l.b16 %v1491
    %v1742 = vunpack.c.l.b16 %v1492
    %v1743 = vunpack.c.l.b16 %v1493
    %v1744 = vunpack.c.l.b16 %v1494
    %v1745 = vunpack.c.l.b16 %v1495
    %v1746 = vunpack.c.l.b16 %v1496
    %v1747 = vunpack.c.l.b16 %v1497
    %v1748 = vunpack.c.l.b16 %v1498
    %v1749 = vunpack.c.l.b16 %v1499
    %v1750 = vunpack.c.l.b16 %v1500
    %v1751 = vunpack.c.l.b16 %v1501
    %v1752 = vunpack.c.l.b16 %v1502
    %v1753 = vunpack.c.l.b16 %v1503
    %v1754 = vunpack.c.l.b16 %v1504
    %v1755 = vunpack.c.l.b16 %v1505
    %v1756 = vunpack.c.l.b16 %v1506
    %v1757 = vunpack.c.l.b16 %v1507
    %v1758 = vunpack.c.l.b16 %v1508
    %v1759 = vunpack.c.l.b16 %v1509
    %v1760 = vunpack.c.l.b16 %v1510
    %v1761 = vunpack.c.l.b16 %v1511
    %v1762 = vunpack.c.l.b16 %v1512
    %v1763 = vunpack.c.l.b16 %v1513
    %v1764 = vunpack.c.l.b16 %v1514
    %v1765 = vunpack.c.l.b16 %v1515
    %v1766 = vunpack.c.l.b16 %v1516
    %v1767 = vunpack.c.l.b16 %v1517
    %v1768 = vunpack.c.l.b16 %v1518
    %v1769 = vunpack.c.l.b16 %v1519
    %v1770 = vunpack.c.l.b16 %v1520
    %v1771 = vunpack.c.l.b16 %v1521
    %v1772 = vunpack.c.l.b16 %v1522
    %v1773 = vunpack.c.l.b16 %v1523
    %v1774 = vunpack.c.l.b16 %v1524
    %v1775 = vunpack.c.l.b16 %v1525
    %v1776 = vunpack.c.l.b16 %v1526
    %v1777 = vunpack.c.l.b16 %v1527
    %v1778 = vunpack.c.l.b16 %v1528
    %v1779 = vunpack.c.l.b16 %v1529
    %v1780 = vunpack.c.l.b16 %v1530
    %v1781 = vunpack.c.l.b16 %v1531
    %v1782 = vunpack.c.l.b16 %v1532
    %v1783 = vunpack.c.l.b16 %v1533
    %v1784 = vunpack.c.l.b16 %v1534
    %v1785 = vunpack.c.l.b16 %v1535
    %v1786 = vunpack.c.l.b16 %v1536
    %v1787 = vunpack.c.l.b16 %v1537
    %v1788 = vunpack.c.l.b16 %v1538
    %v1789 = vunpack.c.l.b16 %v1539
    %v1790 = vunpack.c.l.b16 %v1540
    %v1791 = vunpack.c.l.b16 %v1541
    %v1792 = vunpack.c.l.b16 %v1542
    %v1793 = vunpack.c.l.b16 %v1543
    %v1794 = vunpack.c.l.b16 %v1544
    %v1795 = vunpack.c.l.b16 %v1545
    %v1796 = vunpack.c.l.b16 %v1546
    %v1797 = vunpack.c.l.b16 %v1547
    %v1798 = vunpack.c.l.b16 %v1548
    %v1799 = vunpack.c.l.b16 %v1549
    %v1800 = vunpack.c.l.b16 %v1550
    %v1801 = vunpack.c.l.b16 %v1551
    %v1802 = vunpack.c.l.b16 %v1552
    %v1803 = vunpack.c.l.b16 %v1553
    %v1804 = vunpack.c.l.b16 %v1554
    %v1805 = vunpack.c.l.b16 %v1555
    %v1806 = vunpack.c.l.b16 %v1556
    %v1807 = vunpack.c.l.b16 %v1557
    %v1808 = vunpack.c.l.b16 %v1558
    %v1809 = vunpack.c.l.b16 %v1559
    %v1810 = vunpack.c.l.b16 %v1560
    %v1811 = vunpack.c.l.b16 %v1561
    %v1812 = vunpack.c.l.b16 %v1562
    %v1813 = vunpack.c.l.b16 %v1563
    %v1814 = vunpack.c.l.b16 %v1564
    %v1815 = vunpack.c.l.b16 %v1565
    %v1816 = vunpack.c.l.b16 %v1566
    %v1817 = vunpack.c.l.b16 %v1567
    %v1818 = vunpack.c.l.b16 %v1568
    %v1819 = vunpack.c.l.b16 %v1569
    %v1820 = vunpack.c.l.b16 %v1570
    %v1821 = vunpack.c.l.b16 %v1571
    %v1822 = vunpack.c.l.b16 %v1572
    %v1823 = vunpack.c.l.b16 %v1573
    %v1824 = vunpack.c.l.b16 %v1574
    %v1825 = vunpack.c.l.b16 %v1575
    %v1826 = vunpack.c.l.b16 %v1576
    %v1827 = vunpack.c.l.b16 %v1577
    %v1828 = vunpack.c.l.b16 %v1578
    %v1829 = vunpack.c.l.b16 %v1579
    %v1830 = vunpack.c.l.b16 %v1580
    %v1831 = vunpack.c.l.b16 %v1581
    %v1832 = vunpack.c.l.b16 %v1582
    %v1833 = vunpack.c.l.b16 %v1583
    %v1834 = vunpack.c.l.b16 %v1584
    %v1835 = vunpack.c.l.b16 %v1585
    %v1836 = vunpack.c.l.b16 %v1586
    %v1837 = vunpack.c.l.b16 %v1587
    %v1838 = vunpack.c.l.b16 %v1588
    %v1839 = vunpack.c.l.b16 %v1589
    %v1840 = vunpack.c.l.b16 %v1590
    %v1841 = vpack.c.b16 %v1717, %v1716
    %v1842 = vpack.c.b16 %v1719, %v1718
    %v1843 = vpack.c.b16 %v1721, %v1720
    %v1844 = vpack.c.b16 %v1723, %v1722
    %v1845 = vpack.c.b16 %v1725, %v1724
    %v1846 = vpack.c.b16 %v1727, %v1726
    %v1847 = vpack.c.b16 %v1729, %v1728
    %v1848 = vpack.c.b16 %v1731, %v1730
    %v1849 = vpack.c.b16 %v1733, %v1732
    %v1850 = vpack.c.b16 %v1735, %v1734
    %v1851 = vpack.c.b16 %v1737, %v1736
    %v1852 = vpack.c.b16 %v1739, %v1738
    %v1853 = vpack.c.b16 %v1741, %v1740
    %v1854 = vpack.c.b16 %v1743, %v1742
    %v1855 = vpack.c.b16 %v1745, %v1744
    %v1856 = vpack.c.b16 %v1747, %v1746
    %v1857 = vpack.c.b16 %v1749, %v1748
    %v1858 = vpack.c.b16 %v1751, %v1750
    %v1859 = vpack.c.b16 %v1753, %v1752
    %v1860 = vpack.c.b16 %v1755, %v1754
    %v1861 = vpack.c.b16 %v1757, %v1756
    %v1862 = vpack.c.b16 %v1759, %v1758
    %v1863 = vpack.c.b16 %v1761, %v1760
    %v1864 = vpack.c.b16 %v1763, %v1762
    %v1865 = vpack.c.b16 %v1765, %v1764
    %v1866 = vpack.c.b16 %v1767, %v1766
    %v1867 = vpack.c.b16 %v1769, %v1768
    %v1868 = vpack.c.b16 %v1771, %v1770
    %v1869 = vpack.c.b16 %v1773, %v1772
    %v1870 = vpack.c.b16 %v1775, %v1774
    %v1871 = vpack.c.b16 %v1777, %v1776
    %v1872 = vpack.c.b16 %v1779, %v1778
    %v1873 = vpack.c.b16 %v1781, %v1780
    %v1874 = vpack.c.b16 %v1783, %v1782
    %v1875 = vpack.c.b16 %v1785, %v1784
    %v1876 = vpack.c.b16 %v1787, %v1786
    %v1877 = vpack.c.b16 %v1789, %v1788
    %v1878 = vpack.c.b16 %v1791, %v1790
    %v1879 = vpack.c.b16 %v1793, %v1792
    %v1880 = vpack.c.b16 %v1795, %v1794
    %v1881 = vpack.c.b16 %v1797, %v1796
    %v1882 = vpack.c.b16 %v1799, %v1798
    %v1883 = vpack.c.b16 %v1801, %v1800
    %v1884 = vpack.c.b16 %v1803, %v1802
    %v1885 = vpack.c.b16 %v1805, %v1804
    %v1886 = vpack.c.b16 %v1807, %v1806
    %v1887 = vpack.c.b16 %v1809, %v1808
    %v1888 = vpack.c.b16 %v1811, %v1810
    %v1889 = vpack.c.b16 %v1813, %v1812
    %v1890 = vpack.c.b16 %v1815, %v1814
    %v1891 = vpack.c.b16 %v1817, %v1816
    %v1892 = vpack.c.b16 %v1819, %v1818
    %v1893 = vpack.c.b16 %v1821, %v1820
    %v1894 = vpack.c.b16 %v1823, %v1822
    %v1895 = vpack.c.b16 %v1825, %v1824
    %v1896 = vpack.c.b16 %v1827, %v1826
    %v1897 = vpack.c.b16 %v1829, %v1828
    %v1898 = vpack.c.b16 %v1831, %v1830
    %v1899 = vpack.c.b16 %v1833, %v1832
    %v1900 = vpack.c.b16 %v1835, %v1834
    %v1901 = vpack.c.b16 %v1837, %v1836
    %v1902 = vpack.c.b16 %v1839, %v1838
    %v1903 = vpack.c.b16 %v1840, %v1840
    %v1967 = vsel %vm740, %v1464, 0
    %v1970 = vsel %vm744, %v1903, 0
    %1972 = vmatprep.subr.bf16.mxu0 0
    %1973 = vmatpush1.bf16.msra.mxu0 %v1841
    %1974 = vmatprep.subr.bf16.mxu0 0
    %1975 = vmatpush1.bf16.msra.mxu0 %v1842
    %1976 = vmatprep.subr.bf16.mxu0 0
    %1977 = vmatpush1.bf16.msra.mxu0 %v1843
    %1978 = vmatprep.subr.bf16.mxu0 0
    %1979 = vmatpush1.bf16.msra.mxu0 %v1844
    %1980 = vmatprep.subr.bf16.mxu0 0
    %1981 = vmatpush1.bf16.msra.mxu0 %v1845
    %1982 = vmatprep.subr.bf16.mxu0 0
    %1983 = vmatpush1.bf16.msra.mxu0 %v1846
    %1984 = vmatprep.subr.bf16.mxu0 0
    %1985 = vmatpush1.bf16.msra.mxu0 %v1847
    %1986 = vmatprep.subr.bf16.mxu0 0
    %1987 = vmatpush1.bf16.msra.mxu0 %v1848
    %1988 = vmatprep.subr.bf16.mxu0 0
    %1989 = vmatpush1.bf16.msra.mxu0 %v1849
    %1990 = vmatprep.subr.bf16.mxu0 0
    %1991 = vmatpush1.bf16.msra.mxu0 %v1850
    %1992 = vmatprep.subr.bf16.mxu0 0
    %1993 = vmatpush1.bf16.msra.mxu0 %v1851
    %1994 = vmatprep.subr.bf16.mxu0 0
    %1995 = vmatpush1.bf16.msra.mxu0 %v1852
    %1996 = vmatprep.subr.bf16.mxu0 0
    %1997 = vmatpush1.bf16.msra.mxu0 %v1853
    %1998 = vmatprep.subr.bf16.mxu0 0
    %1999 = vmatpush1.bf16.msra.mxu0 %v1854
    %2000 = vmatprep.subr.bf16.mxu0 0
    %2001 = vmatpush1.bf16.msra.mxu0 %v1855
    %2002 = vmatprep.subr.bf16.mxu0 0
    %2003 = vmatpush1.bf16.msra.mxu0 %v1856
    %2004 = vmatprep.mubr.bf16.mxu0 %v1458
    %2005 = vmatmul.mubr.bf16.gmra.mrb[0].mxu0 %v1457
    %v2006 = vpop.f32.mrb[0].mxu0
    %v2007 = vadd.f32 0.0, %v2006
    %v2008 = vpop.f32.mrb[0].mxu0
    %v2009 = vpop.f32.mrb[0].mxu0
    %v2010 = vpop.f32.mrb[0].mxu0
    %2011 = vdwg.mxu0
    %2012 = vmatprep.subr.bf16.mxu0 0
    %2013 = vmatpush1.bf16.msra.mxu0 %v1857
    %2014 = vmatprep.subr.bf16.mxu0 0
    %2015 = vmatpush1.bf16.msra.mxu0 %v1858
    %2016 = vmatprep.subr.bf16.mxu0 0
    %2017 = vmatpush1.bf16.msra.mxu0 %v1859
    %2018 = vmatprep.subr.bf16.mxu0 0
    %2019 = vmatpush1.bf16.msra.mxu0 %v1860
    %2020 = vmatprep.subr.bf16.mxu0 0
    %2021 = vmatpush1.bf16.msra.mxu0 %v1861
    %2022 = vmatprep.subr.bf16.mxu0 0
    %2023 = vmatpush1.bf16.msra.mxu0 %v1862
    %2024 = vmatprep.subr.bf16.mxu0 0
    %2025 = vmatpush1.bf16.msra.mxu0 %v1863
    %2026 = vmatprep.subr.bf16.mxu0 0
    %2027 = vmatpush1.bf16.msra.mxu0 %v1864
    %2028 = vmatprep.subr.bf16.mxu0 0
    %2029 = vmatpush1.bf16.msra.mxu0 %v1865
    %2030 = vmatprep.subr.bf16.mxu0 0
    %2031 = vmatpush1.bf16.msra.mxu0 %v1866
    %2032 = vmatprep.subr.bf16.mxu0 0
    %2033 = vmatpush1.bf16.msra.mxu0 %v1867
    %2034 = vmatprep.subr.bf16.mxu0 0
    %2035 = vmatpush1.bf16.msra.mxu0 %v1868
    %2036 = vmatprep.subr.bf16.mxu0 0
    %2037 = vmatpush1.bf16.msra.mxu0 %v1869
    %2038 = vmatprep.subr.bf16.mxu0 0
    %2039 = vmatpush1.bf16.msra.mxu0 %v1870
    %2040 = vmatprep.subr.bf16.mxu0 0
    %2041 = vmatpush1.bf16.msra.mxu0 %v1871
    %2042 = vmatprep.subr.bf16.mxu0 0
    %2043 = vmatpush1.bf16.msra.mxu0 %v1872
    %2044 = vmatprep.mubr.bf16.mxu0 %v1460
    %2045 = vmatmul.mubr.bf16.gmra.mrb[0].mxu0 %v1459
    %v2046 = vpop.f32.mrb[0].mxu0
    %v2047 = vadd.f32 %v2007, %v2046
    %v2048 = vpop.f32.mrb[0].mxu0
    %v2049 = vpop.f32.mrb[0].mxu0
    %v2050 = vpop.f32.mrb[0].mxu0
    %2051 = vdwg.mxu0
    %2052 = vmatprep.subr.bf16.mxu0 0
    %2053 = vmatpush1.bf16.msra.mxu0 %v1873
    %2054 = vmatprep.subr.bf16.mxu0 0
    %2055 = vmatpush1.bf16.msra.mxu0 %v1874
    %2056 = vmatprep.subr.bf16.mxu0 0
    %2057 = vmatpush1.bf16.msra.mxu0 %v1875
    %2058 = vmatprep.subr.bf16.mxu0 0
    %2059 = vmatpush1.bf16.msra.mxu0 %v1876
    %2060 = vmatprep.subr.bf16.mxu0 0
    %2061 = vmatpush1.bf16.msra.mxu0 %v1877
    %2062 = vmatprep.subr.bf16.mxu0 0
    %2063 = vmatpush1.bf16.msra.mxu0 %v1878
    %2064 = vmatprep.subr.bf16.mxu0 0
    %2065 = vmatpush1.bf16.msra.mxu0 %v1879
    %2066 = vmatprep.subr.bf16.mxu0 0
    %2067 = vmatpush1.bf16.msra.mxu0 %v1880
    %2068 = vmatprep.subr.bf16.mxu0 0
    %2069 = vmatpush1.bf16.msra.mxu0 %v1881
    %2070 = vmatprep.subr.bf16.mxu0 0
    %2071 = vmatpush1.bf16.msra.mxu0 %v1882
    %2072 = vmatprep.subr.bf16.mxu0 0
    %2073 = vmatpush1.bf16.msra.mxu0 %v1883
    %2074 = vmatprep.subr.bf16.mxu0 0
    %2075 = vmatpush1.bf16.msra.mxu0 %v1884
    %2076 = vmatprep.subr.bf16.mxu0 0
    %2077 = vmatpush1.bf16.msra.mxu0 %v1885
    %2078 = vmatprep.subr.bf16.mxu0 0
    %2079 = vmatpush1.bf16.msra.mxu0 %v1886
    %2080 = vmatprep.subr.bf16.mxu0 0
    %2081 = vmatpush1.bf16.msra.mxu0 %v1887
    %2082 = vmatprep.subr.bf16.mxu0 0
    %2083 = vmatpush1.bf16.msra.mxu0 %v1888
    %2084 = vmatprep.mubr.bf16.mxu0 %v1462
    %2085 = vmatmul.mubr.bf16.gmra.mrb[0].mxu0 %v1461
    %v2086 = vpop.f32.mrb[0].mxu0
    %v2087 = vadd.f32 %v2047, %v2086
    %v2088 = vpop.f32.mrb[0].mxu0
    %v2089 = vpop.f32.mrb[0].mxu0
    %v2090 = vpop.f32.mrb[0].mxu0
    %2091 = vdwg.mxu0
    %2092 = vmatprep.subr.bf16.mxu0 0
    %2093 = vmatpush1.bf16.msra.mxu0 %v1889
    %2094 = vmatprep.subr.bf16.mxu0 0
    %2095 = vmatpush1.bf16.msra.mxu0 %v1890
    %2096 = vmatprep.subr.bf16.mxu0 0
    %2097 = vmatpush1.bf16.msra.mxu0 %v1891
    %2098 = vmatprep.subr.bf16.mxu0 0
    %2099 = vmatpush1.bf16.msra.mxu0 %v1892
    %2100 = vmatprep.subr.bf16.mxu0 0
    %2101 = vmatpush1.bf16.msra.mxu0 %v1893
    %2102 = vmatprep.subr.bf16.mxu0 0
    %2103 = vmatpush1.bf16.msra.mxu0 %v1894
    %2104 = vmatprep.subr.bf16.mxu0 0
    %2105 = vmatpush1.bf16.msra.mxu0 %v1895
    %2106 = vmatprep.subr.bf16.mxu0 0
    %2107 = vmatpush1.bf16.msra.mxu0 %v1896
    %2108 = vmatprep.subr.bf16.mxu0 0
    %2109 = vmatpush1.bf16.msra.mxu0 %v1897
    %2110 = vmatprep.subr.bf16.mxu0 0
    %2111 = vmatpush1.bf16.msra.mxu0 %v1898
    %2112 = vmatprep.subr.bf16.mxu0 0
    %2113 = vmatpush1.bf16.msra.mxu0 %v1899
    %2114 = vmatprep.subr.bf16.mxu0 0
    %2115 = vmatpush1.bf16.msra.mxu0 %v1900
    %2116 = vmatprep.subr.bf16.mxu0 0
    %2117 = vmatpush1.bf16.msra.mxu0 %v1901
    %2118 = vmatprep.subr.bf16.mxu0 0
    %2119 = vmatpush1.bf16.msra.mxu0 %v1902
    %2120 = vmatprep.subr.bf16.mxu0 0
    %2121 = vmatpush1.bf16.msra.mxu0 %v1970
    %2122 = vmatprep.subr.bf16.mxu0 0
    %2123 = vmatpush1.bf16.msra.mxu0 0
    %2124 = vmatprep.mubr.bf16.mxu0 %v1967
    %2125 = vmatmul.mubr.bf16.gmra.mrb[0].mxu0 %v1463
    %v2126 = vpop.f32.mrb[0].mxu0
    %v2127 = vadd.f32 %v2087, %v2126
    %v2128 = vpop.f32.mrb[0].mxu0
    %v2129 = vpop.f32.mrb[0].mxu0
    %v2130 = vpop.f32.mrb[0].mxu0
    %2131 = vdwg.mxu0
    %v2132 = vadd.f32 %v1444, %v2127
    %v2133 = vld [vmem:[#allocation10] sm:$0x1]
    %v2135 = vlaneseq
    %v2136 = vshrl.u32 %v2135, 7
    %v2137 = vsub.s32 0, %v2136
    %v2138 = vrot.slane %v2133, %v2137
    %v2140 = vadd.f32 %v2132, %v2138
    %2141 = vst [vmem:[#allocation11] sm:$0xff] %v2140
    // Predicated region
    $region42: #{tpu_custom_call.1} parent=1 // pred_check
      _
    $region43: #{tpu_custom_call.1} parent=1 // pred_check_branch
      %2143 = sbr.rel (0) target = $region45
    $region44: #{tpu_custom_call.1} parent=1 // pred_region
      %s2145 = ssub.s32 128, 128
      %2146 = vsyncadd [#allocation4], %s2145
      %s2148 = sshll.u32 [#allocation11], 4
      %s2149 = int_to_ptr.vmem [resolvable:$true] %s2148
      %2151 = dma.vmem_to_hbm [thread:$0]  %s2149, 128, %s5, [#allocation4]
    $region45: #{tpu_custom_call.1} parent=1 // pred_fallthru
      _
    // Predicated region
    $region46: #{tpu_custom_call.1} parent=1 // pred_check
      _
    $region47: #{tpu_custom_call.1} parent=1 // pred_check_branch
      %2153 = sbr.rel (0) target = $region49
    $region48: #{tpu_custom_call.1} parent=1 // pred_region
      %2154 = dma.done [#allocation4], 128
    $region49: #{tpu_custom_call.1} parent=1 // pred_fallthru
      _
    %2155 = vsyncpa [#allocation3], 1
    %2156 = vsyncpa [#allocation6], 1
    %2157 = vsyncpa [#allocation9], 1
    %2158 = vsyncpa [#allocation4], 1

</llo_original>
